<compile_context>
chip_gen: v7x
topology: tpu7x:2x2x1
jax: 0.10.0
libtpu: 0.0.40
codegen_flags: <defaults>
</compile_context>

<pallas_src>
import jax
import jax.numpy as jnp
from jax.experimental import pallas as pl
from jax.experimental.pallas import tpu as pltpu


def _round_up(x, m):
    return ((x + m - 1) // m) * m


def write_unit_kernel(nvalid_ref,
                      mem_ref, info_ref, ctrl_ref, pc_ref, pm_ref,
                      wca_ref, bca_ref,
                      wlm_ref, wli_ref, wls_ref, blin_ref,
                      wg_ref, bg_ref,
                      out_ref):
    f32 = jnp.float32
    mem16 = mem_ref[...]                                           # [tb, Dp] bf16
    info16 = info_ref[...]
    ctrl16 = ctrl_ref[...]

    # control projection with the attn-linear column scale already folded in
    # (attn-linear bias dropped: softmax is shift-invariant)
    cpw = (jnp.dot(ctrl16, wca_ref[...], preferred_element_type=f32)
           + bca_ref[...].astype(f32))                             # [tb, Dp] f32
    cpw16 = cpw.astype(jnp.bfloat16)

    # attention logits over the T_max slots (bf16 product, f32 accumulation),
    # masked to the first n_valid previous steps before the softmax stats.
    scores = jnp.sum(pc_ref[...] * cpw16[:, None, :], axis=-1,
                     dtype=f32)                                    # [tb, T]
    n = nvalid_ref[0]
    t_idx = jax.lax.broadcasted_iota(jnp.int32, scores.shape, 1)
    scores = jnp.where(t_idx < n, scores, jnp.float32(-1e30))

    m = jnp.max(scores, axis=-1, keepdims=True)
    e = jnp.exp(scores - m)
    attn = e * pl.reciprocal(jnp.sum(e, axis=-1, keepdims=True), approx=True)
    attn16 = attn.astype(jnp.bfloat16)                             # [tb, T]

    # attention-weighted summary of previous memories (bf16 prod, f32 acc)
    self_smry = jnp.sum(pm_ref[...] * attn16[:, :, None], axis=1,
                        dtype=f32)                                 # [tb, Dp]

    # cat([memory, info, self_smry]) @ W_lin + b, decomposed (no concat).
    pre = (jnp.dot(mem16, wlm_ref[...], preferred_element_type=f32)
           + jnp.dot(info16, wli_ref[...], preferred_element_type=f32)
           + jnp.dot(self_smry.astype(jnp.bfloat16), wls_ref[...],
                     preferred_element_type=f32)
           + blin_ref[...].astype(f32))

    # gate: the PyTorch code gates on the *projected* control; that projection
    # is folded into wg/bg at prep time, so z comes straight from raw ctrl.
    z = jax.nn.sigmoid(jnp.dot(ctrl16, wg_ref[...], preferred_element_type=f32)
                       + bg_ref[...].astype(f32))

    mem = mem16.astype(f32)
    out_ref[...] = (pre * z + mem * (1.0 - z)).astype(out_ref.dtype)


def prepare_write_unit_params(params, *, dtype=jnp.bfloat16):
    """One-time prep: fold attn-linear scale and gate through the control
    projection, split the 3D->D linear, pad features to 128, cast to bf16."""
    D = params["w_cattn_proj"].shape[0]
    Dp = _round_up(D, 128)

    wcap = params["w_cattn_proj"].astype(jnp.float32)        # [D, D]
    bcap = params["b_cattn_proj"].astype(jnp.float32)        # [D]
    wcal = params["w_cattn_lin"][:, 0].astype(jnp.float32)   # [D]
    wg = params["w_gate"].astype(jnp.float32)                # [D, D]
    bg = params["b_gate"].astype(jnp.float32)                # [D]
    w_lin = params["w_lin"].astype(jnp.float32)              # [3D, D]

    # attn-linear column scale folded into the control projection.
    wca = wcap * wcal[None, :]
    bca = bcap * wcal
    # gate folded through the control projection: z = sigmoid(ctrl @ wg' + bg').
    wg_f = wcap @ wg
    bg_f = bcap @ wg + bg

    def pad_mat(w):                      # [D, D] -> [Dp, Dp]
        return jnp.zeros((Dp, Dp), dtype).at[:D, :D].set(w.astype(dtype))

    def pad_vec(b):                      # [D] -> [1, Dp]
        return jnp.zeros((1, Dp), dtype).at[0, :D].set(b.astype(dtype))

    return {
        "wca": pad_mat(wca), "bca": pad_vec(bca),
        "wlm": pad_mat(w_lin[0 * D:1 * D]),
        "wli": pad_mat(w_lin[1 * D:2 * D]),
        "wls": pad_mat(w_lin[2 * D:3 * D]),
        "blin": pad_vec(params["b_lin"]),
        "wg": pad_mat(wg_f), "bg": pad_vec(bg_f),
    }


def write_unit(memory, info, control, prev_controls, prev_memories, prepared,
               *, n_valid=None, rtom=False, batch_tile=256, buffer_depth=2):
    """Forward for WriteUnit(rtom=False, self_attn=True, gate=True, gate_shared=False).

    prev_controls / prev_memories: fixed-capacity [B, T_max, D] buffers (or lists
    that are concatenated once); n_valid (>= 1) is the number of valid slots —
    the rest are masked inside the kernel, so the kernel compiles once per T_max.
    """
    if rtom:
        return info   # rtom=True path is an identity on `info`; no kernel needed.

    B, D = memory.shape
    Dp = prepared["wca"].shape[0]

    if isinstance(prev_controls, (list, tuple)):
        prev_controls = jnp.concatenate(prev_controls, axis=1)    # [B, T, D]
    if isinstance(prev_memories, (list, tuple)):
        prev_memories = jnp.concatenate(prev_memories, axis=1)    # [B, T, D]
    T = prev_controls.shape[1]
    assert T >= 1, "T=0 (no previous MAC steps) must be handled outside the kernel"
    if n_valid is None:
        n_valid = T
    n_arr = jnp.asarray(n_valid, jnp.int32).reshape((1,))

    # Batch tiling: prefer >= 2 grid tiles so v7x's second TensorCore gets work.
    Bp8 = _round_up(B, 8)
    tb = max(8, (min(batch_tile, Bp8) // 8) * 8)
    if Bp8 // tb < 2 and Bp8 >= 16:
        tb = max(8, _round_up(Bp8 // 2, 8))
    Bp = _round_up(B, tb)
    nb = Bp // tb

    def to_blk(x):
        # Cast to bf16 + pad; both become no-ops when the caller already keeps
        # activations in a padded bf16 layout (recommended for the ring buffers).
        x = x.astype(jnp.bfloat16)
        if x.ndim == 2:
            pads = [(0, Bp - B), (0, Dp - D)]
        else:
            pads = [(0, Bp - B), (0, 0), (0, Dp - D)]
        if any(p[1] for p in pads):
            x = jnp.pad(x, pads)
        return x

    mem_b, info_b, ctrl_b = to_blk(memory), to_blk(info), to_blk(control)
    pc_b, pm_b = to_blk(prev_controls), to_blk(prev_memories)

    def act3_spec():
        idx = lambda i, n: (i, 0, 0)
        if buffer_depth > 2:
            return pl.BlockSpec((tb, T, Dp), idx,
                                pipeline_mode=pl.Buffered(buffer_depth))
        return pl.BlockSpec((tb, T, Dp), idx)

    act2 = pl.BlockSpec((tb, Dp), lambda i, n: (i, 0))
    act3 = act3_spec()
    wmat = pl.BlockSpec((Dp, Dp), lambda i, n: (0, 0))   # weights resident across tiles
    wvec = pl.BlockSpec((1, Dp), lambda i, n: (0, 0))

    # Explicit VMEM budget: resident bf16 weights + buffered activation tiles.
    wbytes = sum(int(v.size) * v.dtype.itemsize for v in prepared.values())
    blk2 = tb * Dp * 2                               # bf16 2-D tile
    blk3 = tb * T * Dp * 2                           # bf16 3-D tile
    footprint = wbytes + 4 * blk2 * 2 + 2 * blk3 * max(2, buffer_depth)
    vmem_limit = int(min(64 << 20, max(16 << 20, int(1.5 * footprint))))

    flops = 2 * Bp * Dp * Dp * 5 + 2 * Bp * T * Dp * 2
    bytes_accessed = 2 * Bp * Dp * (4 + 2 * T) + wbytes + 4
    cost = pl.CostEstimate(flops=int(flops),
                           transcendentals=int(Bp * (T + Dp)),
                           bytes_accessed=int(bytes_accessed))

    out = pl.pallas_call(
        write_unit_kernel,
        out_shape=jax.ShapeDtypeStruct((Bp, Dp), jnp.bfloat16),
        grid_spec=pltpu.PrefetchScalarGridSpec(
            num_scalar_prefetch=1,
            grid=(nb,),
            in_specs=[act2, act2, act2, act3, act3,
                      wmat, wvec,
                      wmat, wmat, wmat, wvec,
                      wmat, wvec],
            out_specs=act2),
        compiler_params=pltpu.CompilerParams(
            dimension_semantics=("parallel",),
            vmem_limit_bytes=vmem_limit),
        cost_estimate=cost,
    )(n_arr, mem_b, info_b, ctrl_b, pc_b, pm_b,
      prepared["wca"], prepared["bca"],
      prepared["wlm"], prepared["wli"], prepared["wls"], prepared["blin"],
      prepared["wg"], prepared["bg"])

    if Bp == B and Dp == D:
        return out
    return out[:B, :D]


def init_params(key, module_dim):
    D = module_dim
    ks = jax.random.split(key, 8)
    s = 0.1
    return {
        "w_cattn_proj": s * jax.random.normal(ks[0], (D, D), jnp.float32),
        "b_cattn_proj": s * jax.random.normal(ks[1], (D,), jnp.float32),
        "w_cattn_lin": s * jax.random.normal(ks[2], (D, 1), jnp.float32),
        "b_cattn_lin": s * jax.random.normal(ks[3], (1,), jnp.float32),
        "w_lin": s * jax.random.normal(ks[4], (3 * D, D), jnp.float32),
        "b_lin": s * jax.random.normal(ks[5], (D,), jnp.float32),
        "w_gate": s * jax.random.normal(ks[6], (D, D), jnp.float32),
        "b_gate": s * jax.random.normal(ks[7], (D,), jnp.float32),
    }


def write_unit_ref(memory, info, control, prev_controls, prev_memories, params):
    """Pure-JAX reference mirroring WriteUnit.forward
    (rtom=False, self_attn=True, gate=True, gate_shared=False), f32 params."""
    cp = control @ params["w_cattn_proj"] + params["b_cattn_proj"]
    pcs = jnp.concatenate(prev_controls, axis=1)
    inter = pcs * cp[:, None, :]
    logits = (inter @ params["w_cattn_lin"] + params["b_cattn_lin"])[..., 0]
    attn = jax.nn.softmax(logits, axis=1)[..., None]
    pms = jnp.concatenate(prev_memories, axis=1)
    self_smry = jnp.sum(attn * pms, axis=1)
    cat = jnp.concatenate([memory, info, self_smry], axis=-1)
    new_mem = cat @ params["w_lin"] + params["b_lin"]
    z = jax.nn.sigmoid(cp @ params["w_gate"] + params["b_gate"])
    return new_mem * z + memory * (1.0 - z)


if __name__ == "__main__":
    B, MODULE_DIM, T, T_MAX = 16, 32, 4, 8   # T = # previous MAC steps, T_MAX = buffer capacity

    key = jax.random.PRNGKey(0)
    k_m, k_i, k_c, k_pc, k_pm, k_p, k_junk = jax.random.split(key, 7)

    memory = jax.random.normal(k_m, (B, MODULE_DIM), jnp.float32)
    info = jax.random.normal(k_i, (B, MODULE_DIM), jnp.float32)
    control = jax.random.normal(k_c, (B, MODULE_DIM), jnp.float32)
    prev_controls = [jax.random.normal(jax.random.fold_in(k_pc, t),
                                       (B, 1, MODULE_DIM), jnp.float32) for t in range(T)]
    prev_memories = [jax.random.normal(jax.random.fold_in(k_pm, t),
                                       (B, 1, MODULE_DIM), jnp.float32) for t in range(T)]

    # Fixed-capacity [B, T_MAX, D] buffers (as a MAC loop would keep) with
    # garbage in the unused slots; the kernel masks slots >= n_valid, so the
    # compiled kernel is reused at every MAC step (no per-step recompilation).
    junk_c = jax.random.normal(jax.random.fold_in(k_junk, 0),
                               (B, T_MAX - T, MODULE_DIM), jnp.float32)
    junk_m = jax.random.normal(jax.random.fold_in(k_junk, 1),
                               (B, T_MAX - T, MODULE_DIM), jnp.float32)
    pc_buf = jnp.concatenate([jnp.concatenate(prev_controls, axis=1), junk_c], axis=1)
    pm_buf = jnp.concatenate([jnp.concatenate(prev_memories, axis=1), junk_m], axis=1)

    params = init_params(k_p, MODULE_DIM)
    prepared = prepare_write_unit_params(params, dtype=jnp.bfloat16)

    out = write_unit(memory, info, control, pc_buf, pm_buf, prepared, n_valid=T)
    out = jax.block_until_ready(out)

    ref = write_unit_ref(memory, info, control, prev_controls, prev_memories, params)
    assert out.shape == (B, MODULE_DIM)
    assert out.dtype == jnp.bfloat16
    max_err = float(jnp.max(jnp.abs(out.astype(jnp.float32) - ref)))
    # bf16 weights + bf16 activation I/O + bf16 output -> loosened tolerance
    assert jnp.allclose(out.astype(jnp.float32), ref, atol=3e-2, rtol=3e-2), (
        f"mismatch vs JAX reference (max abs err {max_err})")

    print("KERNEL_OK")
</pallas_src>

<mosaic_0001>
module attributes {stable_mosaic.version = 11 : i64} {
  func.func @write_unit_kernel(%arg0: i32, %arg1: memref<1xi32, #tpu.memory_space<smem>>, %arg2: memref<8x128xbf16, #tpu.memory_space<vmem>>, %arg3: memref<8x128xbf16, #tpu.memory_space<vmem>>, %arg4: memref<8x128xbf16, #tpu.memory_space<vmem>>, %arg5: memref<8x8x128xbf16, #tpu.memory_space<vmem>>, %arg6: memref<8x8x128xbf16, #tpu.memory_space<vmem>>, %arg7: memref<128x128xbf16, #tpu.memory_space<vmem>>, %arg8: memref<1x128xbf16, #tpu.memory_space<vmem>>, %arg9: memref<128x128xbf16, #tpu.memory_space<vmem>>, %arg10: memref<128x128xbf16, #tpu.memory_space<vmem>>, %arg11: memref<128x128xbf16, #tpu.memory_space<vmem>>, %arg12: memref<1x128xbf16, #tpu.memory_space<vmem>>, %arg13: memref<128x128xbf16, #tpu.memory_space<vmem>>, %arg14: memref<1x128xbf16, #tpu.memory_space<vmem>>, %arg15: memref<8x128xbf16, #tpu.memory_space<vmem>>) attributes {dimension_semantics = [#tpu.dimension_semantics<parallel>], iteration_bounds = array<i64: 2>, scalar_prefetch = 1 : i64, scratch_operands = 0 : i64, tpu.core_type = #tpu.core_type<tc>, window_params = [{transform_indices = @transform_0, window_bounds = array<i64: 8, 128>}, {transform_indices = @transform_1, window_bounds = array<i64: 8, 128>}, {transform_indices = @transform_2, window_bounds = array<i64: 8, 128>}, {transform_indices = @transform_3, window_bounds = array<i64: 8, 8, 128>}, {transform_indices = @transform_4, window_bounds = array<i64: 8, 8, 128>}, {pipeline_mode = #tpu.pipeline_mode<synchronous>, transform_indices = @transform_5, window_bounds = array<i64: 128, 128>}, {pipeline_mode = #tpu.pipeline_mode<synchronous>, transform_indices = @transform_6, window_bounds = array<i64: 1, 128>}, {pipeline_mode = #tpu.pipeline_mode<synchronous>, transform_indices = @transform_7, window_bounds = array<i64: 128, 128>}, {pipeline_mode = #tpu.pipeline_mode<synchronous>, transform_indices = @transform_8, window_bounds = array<i64: 128, 128>}, {pipeline_mode = #tpu.pipeline_mode<synchronous>, transform_indices = @transform_9, window_bounds = array<i64: 128, 128>}, {pipeline_mode = #tpu.pipeline_mode<synchronous>, transform_indices = @transform_10, window_bounds = array<i64: 1, 128>}, {pipeline_mode = #tpu.pipeline_mode<synchronous>, transform_indices = @transform_11, window_bounds = array<i64: 128, 128>}, {pipeline_mode = #tpu.pipeline_mode<synchronous>, transform_indices = @transform_12, window_bounds = array<i64: 1, 128>}, {transform_indices = @transform_13, window_bounds = array<i64: 8, 128>}]} {
    %c0 = arith.constant 0 : index
    %c0_0 = arith.constant 0 : index
    %0 = vector.load %arg2[%c0, %c0_0] : memref<8x128xbf16, #tpu.memory_space<vmem>>, vector<8x128xbf16>
    %c0_1 = arith.constant 0 : index
    %c0_2 = arith.constant 0 : index
    %1 = vector.load %arg3[%c0_1, %c0_2] : memref<8x128xbf16, #tpu.memory_space<vmem>>, vector<8x128xbf16>
    %c0_3 = arith.constant 0 : index
    %c0_4 = arith.constant 0 : index
    %2 = vector.load %arg4[%c0_3, %c0_4] : memref<8x128xbf16, #tpu.memory_space<vmem>>, vector<8x128xbf16>
    %c0_5 = arith.constant 0 : index
    %c0_6 = arith.constant 0 : index
    %3 = vector.load %arg7[%c0_5, %c0_6] : memref<128x128xbf16, #tpu.memory_space<vmem>>, vector<128x128xbf16>
    %cst = arith.constant dense<0.000000e+00> : vector<8x128xf32>
    %4 = tpu.matmul %2, %3, %cst {dimension_numbers = #tpu.dot_dimension_numbers<[1], [0], [0], [1], [0, 0, 1, 1], [], []>} : vector<8x128xbf16>, vector<128x128xbf16>, vector<8x128xf32> -> vector<8x128xf32>
    %c0_7 = arith.constant 0 : index
    %c0_8 = arith.constant 0 : index
    %5 = vector.load %arg8[%c0_7, %c0_8] : memref<1x128xbf16, #tpu.memory_space<vmem>>, vector<1x128xbf16>
    %6 = arith.extf %5 : vector<1x128xbf16> to vector<1x128xf32>
    %7 = vector.broadcast %6 : vector<1x128xf32> to vector<8x128xf32>
    %8 = arith.addf %4, %7 : vector<8x128xf32>
    %9 = arith.truncf %8 : vector<8x128xf32> to vector<8x128xbf16>
    %c0_9 = arith.constant 0 : index
    %c0_10 = arith.constant 0 : index
    %c0_11 = arith.constant 0 : index
    %10 = vector.load %arg5[%c0_9, %c0_10, %c0_11] : memref<8x8x128xbf16, #tpu.memory_space<vmem>>, vector<8x8x128xbf16>
    %11 = vector.shape_cast %9 : vector<8x128xbf16> to vector<8x1x128xbf16>
    %12 = vector.broadcast %11 : vector<8x1x128xbf16> to vector<8x8x128xbf16>
    %13 = arith.mulf %10, %12 : vector<8x8x128xbf16>
    %14 = arith.extf %13 : vector<8x8x128xbf16> to vector<8x8x128xf32>
    %cst_12 = arith.constant dense<0.000000e+00> : vector<8x8xf32>
    %15 = vector.multi_reduction <add>, %14, %cst_12 [2] : vector<8x8x128xf32> to vector<8x8xf32>
    %c0_13 = arith.constant 0 : index
    %16 = memref.load %arg1[%c0_13] : memref<1xi32, #tpu.memory_space<smem>>
    %17 = tpu.iota {dimensions = array<i32: 1>} : vector<8x8xi32>
    %18 = vector.broadcast %16 : i32 to vector<8x8xi32>
    %19 = arith.cmpi slt, %17, %18 : vector<8x8xi32>
    %cst_14 = arith.constant -1.000000e+30 : f32
    %20 = vector.broadcast %cst_14 : f32 to vector<8x8xf32>
    %21 = arith.select %19, %15, %20 : vector<8x8xi1>, vector<8x8xf32>
    %cst_15 = arith.constant dense<0xFF800000> : vector<8xf32>
    %22 = vector.multi_reduction <maximumf>, %21, %cst_15 [1] : vector<8x8xf32> to vector<8xf32>
    %23 = vector.shape_cast %22 : vector<8xf32> to vector<8x1xf32>
    %24 = vector.broadcast %23 : vector<8x1xf32> to vector<8x8xf32>
    %25 = arith.subf %21, %24 : vector<8x8xf32>
    %26 = math.exp %25 : vector<8x8xf32>
    %cst_16 = arith.constant dense<0.000000e+00> : vector<8xf32>
    %27 = vector.multi_reduction <add>, %26, %cst_16 [1] : vector<8x8xf32> to vector<8xf32>
    %28 = vector.shape_cast %27 : vector<8xf32> to vector<8x1xf32>
    %29 = tpu.reciprocal %28 {approx = true} : vector<8x1xf32> -> vector<8x1xf32>
    %30 = vector.broadcast %29 : vector<8x1xf32> to vector<8x8xf32>
    %31 = arith.mulf %26, %30 : vector<8x8xf32>
    %32 = arith.truncf %31 : vector<8x8xf32> to vector<8x8xbf16>
    %c0_17 = arith.constant 0 : index
    %c0_18 = arith.constant 0 : index
    %c0_19 = arith.constant 0 : index
    %33 = vector.load %arg6[%c0_17, %c0_18, %c0_19] : memref<8x8x128xbf16, #tpu.memory_space<vmem>>, vector<8x8x128xbf16>
    %34 = vector.shape_cast %32 : vector<8x8xbf16> to vector<8x8x1xbf16>
    %35 = vector.broadcast %34 : vector<8x8x1xbf16> to vector<8x8x128xbf16>
    %36 = arith.mulf %33, %35 : vector<8x8x128xbf16>
    %37 = arith.extf %36 : vector<8x8x128xbf16> to vector<8x8x128xf32>
    %cst_20 = arith.constant dense<0.000000e+00> : vector<8x128xf32>
    %38 = vector.multi_reduction <add>, %37, %cst_20 [1] : vector<8x8x128xf32> to vector<8x128xf32>
    %c0_21 = arith.constant 0 : index
    %c0_22 = arith.constant 0 : index
    %39 = vector.load %arg9[%c0_21, %c0_22] : memref<128x128xbf16, #tpu.memory_space<vmem>>, vector<128x128xbf16>
    %cst_23 = arith.constant dense<0.000000e+00> : vector<8x128xf32>
    %40 = tpu.matmul %0, %39, %cst_23 {dimension_numbers = #tpu.dot_dimension_numbers<[1], [0], [0], [1], [0, 0, 1, 1], [], []>} : vector<8x128xbf16>, vector<128x128xbf16>, vector<8x128xf32> -> vector<8x128xf32>
    %c0_24 = arith.constant 0 : index
    %c0_25 = arith.constant 0 : index
    %41 = vector.load %arg10[%c0_24, %c0_25] : memref<128x128xbf16, #tpu.memory_space<vmem>>, vector<128x128xbf16>
    %cst_26 = arith.constant dense<0.000000e+00> : vector<8x128xf32>
    %42 = tpu.matmul %1, %41, %cst_26 {dimension_numbers = #tpu.dot_dimension_numbers<[1], [0], [0], [1], [0, 0, 1, 1], [], []>} : vector<8x128xbf16>, vector<128x128xbf16>, vector<8x128xf32> -> vector<8x128xf32>
    %43 = arith.addf %40, %42 : vector<8x128xf32>
    %44 = arith.truncf %38 : vector<8x128xf32> to vector<8x128xbf16>
    %c0_27 = arith.constant 0 : index
    %c0_28 = arith.constant 0 : index
    %45 = vector.load %arg11[%c0_27, %c0_28] : memref<128x128xbf16, #tpu.memory_space<vmem>>, vector<128x128xbf16>
    %cst_29 = arith.constant dense<0.000000e+00> : vector<8x128xf32>
    %46 = tpu.matmul %44, %45, %cst_29 {dimension_numbers = #tpu.dot_dimension_numbers<[1], [0], [0], [1], [0, 0, 1, 1], [], []>} : vector<8x128xbf16>, vector<128x128xbf16>, vector<8x128xf32> -> vector<8x128xf32>
    %47 = arith.addf %43, %46 : vector<8x128xf32>
    %c0_30 = arith.constant 0 : index
    %c0_31 = arith.constant 0 : index
    %48 = vector.load %arg12[%c0_30, %c0_31] : memref<1x128xbf16, #tpu.memory_space<vmem>>, vector<1x128xbf16>
    %49 = arith.extf %48 : vector<1x128xbf16> to vector<1x128xf32>
    %50 = vector.broadcast %49 : vector<1x128xf32> to vector<8x128xf32>
    %51 = arith.addf %47, %50 : vector<8x128xf32>
    %c0_32 = arith.constant 0 : index
    %c0_33 = arith.constant 0 : index
    %52 = vector.load %arg13[%c0_32, %c0_33] : memref<128x128xbf16, #tpu.memory_space<vmem>>, vector<128x128xbf16>
    %cst_34 = arith.constant dense<0.000000e+00> : vector<8x128xf32>
    %53 = tpu.matmul %2, %52, %cst_34 {dimension_numbers = #tpu.dot_dimension_numbers<[1], [0], [0], [1], [0, 0, 1, 1], [], []>} : vector<8x128xbf16>, vector<128x128xbf16>, vector<8x128xf32> -> vector<8x128xf32>
    %c0_35 = arith.constant 0 : index
    %c0_36 = arith.constant 0 : index
    %54 = vector.load %arg14[%c0_35, %c0_36] : memref<1x128xbf16, #tpu.memory_space<vmem>>, vector<1x128xbf16>
    %55 = arith.extf %54 : vector<1x128xbf16> to vector<1x128xf32>
    %56 = vector.broadcast %55 : vector<1x128xf32> to vector<8x128xf32>
    %57 = arith.addf %53, %56 : vector<8x128xf32>
    %58 = arith.negf %57 : vector<8x128xf32>
    %59 = math.exp %58 : vector<8x128xf32>
    %cst_37 = arith.constant 1.000000e+00 : f32
    %60 = vector.broadcast %cst_37 : f32 to vector<8x128xf32>
    %61 = arith.addf %60, %59 : vector<8x128xf32>
    %62 = arith.divf %60, %61 : vector<8x128xf32>
    %63 = arith.extf %0 : vector<8x128xbf16> to vector<8x128xf32>
    %64 = arith.mulf %51, %62 : vector<8x128xf32>
    %cst_38 = arith.constant 1.000000e+00 : f32
    %65 = vector.broadcast %cst_38 : f32 to vector<8x128xf32>
    %66 = arith.subf %65, %62 : vector<8x128xf32>
    %67 = arith.mulf %63, %66 : vector<8x128xf32>
    %68 = arith.addf %64, %67 : vector<8x128xf32>
    %69 = arith.truncf %68 : vector<8x128xf32> to vector<8x128xbf16>
    %c0_39 = arith.constant 0 : index
    %c0_40 = arith.constant 0 : index
    %70 = vector.load %arg15[%c0_39, %c0_40] : memref<8x128xbf16, #tpu.memory_space<vmem>>, vector<8x128xbf16>
    tpu.vector_store %arg15[%c0_39, %c0_40], %69 {strides = array<i32>} : memref<8x128xbf16, #tpu.memory_space<vmem>>, vector<8x128xbf16>,
    return
  }
  func.func @transform_0(%arg0: i32, %arg1: memref<1xi32, #tpu.memory_space<smem>>) -> (i32, i32) {
    %c0_i32 = arith.constant 0 : i32
    %c0_i32_0 = arith.constant 0 : i32
    return %arg0, %c0_i32 : i32, i32
  }
  func.func @transform_1(%arg0: i32, %arg1: memref<1xi32, #tpu.memory_space<smem>>) -> (i32, i32) {
    %c0_i32 = arith.constant 0 : i32
    %c0_i32_0 = arith.constant 0 : i32
    return %arg0, %c0_i32 : i32, i32
  }
  func.func @transform_2(%arg0: i32, %arg1: memref<1xi32, #tpu.memory_space<smem>>) -> (i32, i32) {
    %c0_i32 = arith.constant 0 : i32
    %c0_i32_0 = arith.constant 0 : i32
    return %arg0, %c0_i32 : i32, i32
  }
  func.func @transform_3(%arg0: i32, %arg1: memref<1xi32, #tpu.memory_space<smem>>) -> (i32, i32, i32) {
    %c0_i32 = arith.constant 0 : i32
    %c0_i32_0 = arith.constant 0 : i32
    %c0_i32_1 = arith.constant 0 : i32
    return %arg0, %c0_i32, %c0_i32_0 : i32, i32, i32
  }
  func.func @transform_4(%arg0: i32, %arg1: memref<1xi32, #tpu.memory_space<smem>>) -> (i32, i32, i32) {
    %c0_i32 = arith.constant 0 : i32
    %c0_i32_0 = arith.constant 0 : i32
    %c0_i32_1 = arith.constant 0 : i32
    return %arg0, %c0_i32, %c0_i32_0 : i32, i32, i32
  }
  func.func @transform_5(%arg0: i32, %arg1: memref<1xi32, #tpu.memory_space<smem>>) -> (i32, i32) {
    %c0_i32 = arith.constant 0 : i32
    %c0_i32_0 = arith.constant 0 : i32
    %c0_i32_1 = arith.constant 0 : i32
    return %c0_i32, %c0_i32_0 : i32, i32
  }
  func.func @transform_6(%arg0: i32, %arg1: memref<1xi32, #tpu.memory_space<smem>>) -> (i32, i32) {
    %c0_i32 = arith.constant 0 : i32
    %c0_i32_0 = arith.constant 0 : i32
    %c0_i32_1 = arith.constant 0 : i32
    return %c0_i32, %c0_i32_0 : i32, i32
  }
  func.func @transform_7(%arg0: i32, %arg1: memref<1xi32, #tpu.memory_space<smem>>) -> (i32, i32) {
    %c0_i32 = arith.constant 0 : i32
    %c0_i32_0 = arith.constant 0 : i32
    %c0_i32_1 = arith.constant 0 : i32
    return %c0_i32, %c0_i32_0 : i32, i32
  }
  func.func @transform_8(%arg0: i32, %arg1: memref<1xi32, #tpu.memory_space<smem>>) -> (i32, i32) {
    %c0_i32 = arith.constant 0 : i32
    %c0_i32_0 = arith.constant 0 : i32
    %c0_i32_1 = arith.constant 0 : i32
    return %c0_i32, %c0_i32_0 : i32, i32
  }
  func.func @transform_9(%arg0: i32, %arg1: memref<1xi32, #tpu.memory_space<smem>>) -> (i32, i32) {
    %c0_i32 = arith.constant 0 : i32
    %c0_i32_0 = arith.constant 0 : i32
    %c0_i32_1 = arith.constant 0 : i32
    return %c0_i32, %c0_i32_0 : i32, i32
  }
  func.func @transform_10(%arg0: i32, %arg1: memref<1xi32, #tpu.memory_space<smem>>) -> (i32, i32) {
    %c0_i32 = arith.constant 0 : i32
    %c0_i32_0 = arith.constant 0 : i32
    %c0_i32_1 = arith.constant 0 : i32
    return %c0_i32, %c0_i32_0 : i32, i32
  }
  func.func @transform_11(%arg0: i32, %arg1: memref<1xi32, #tpu.memory_space<smem>>) -> (i32, i32) {
    %c0_i32 = arith.constant 0 : i32
    %c0_i32_0 = arith.constant 0 : i32
    %c0_i32_1 = arith.constant 0 : i32
    return %c0_i32, %c0_i32_0 : i32, i32
  }
  func.func @transform_12(%arg0: i32, %arg1: memref<1xi32, #tpu.memory_space<smem>>) -> (i32, i32) {
    %c0_i32 = arith.constant 0 : i32
    %c0_i32_0 = arith.constant 0 : i32
    %c0_i32_1 = arith.constant 0 : i32
    return %c0_i32, %c0_i32_0 : i32, i32
  }
  func.func @transform_13(%arg0: i32, %arg1: memref<1xi32, #tpu.memory_space<smem>>) -> (i32, i32) {
    %c0_i32 = arith.constant 0 : i32
    %c0_i32_0 = arith.constant 0 : i32
    return %arg0, %c0_i32 : i32, i32
  }
}

</mosaic_0001>

<llo_original>
// kernel: tpu_custom_call.1
$region0: #{tpu_custom_call.1}
  #allocation0 [shape = 'u32[]', space=smem, size = 0x4, offset = 0x4, fixed_abs, tag = 'smem constant byte address 0x4 - core index']
  #allocation1 [shape = 'u32[144,128]{1,0:T(1,128)}', space=vmem, size = 0x12000, scoped, tag = 'internal scratch']
  #allocation2 [shape = 's32[1]{0}', space=sflag, size = 0x4, scoped, tag = 'scoped memory for tpu_custom_call.1']
  #allocation3 [shape = 's32[1]{0:T(128)S(6)}', space=smem, size = 0x200, scoped, tag = 'prefetched SMEM operand 0']
  %s0 = inlined_call_operand.<no memory space> [shape: s32[1], index: 0, kind: input, shape index: {}]
  %s1 = inlined_call_operand.hbm [shape: bf16[16,128], index: 1, kind: input, shape index: {}]
  %s2 = inlined_call_operand.hbm [shape: bf16[16,128], index: 2, kind: input, shape index: {}]
  %s3 = inlined_call_operand.vmem [shape: bf16[16,128], index: 3, kind: input, shape index: {}]
  %s4 = inlined_call_operand.hbm [shape: bf16[16,8,128], index: 4, kind: input, shape index: {}]
  %s5 = inlined_call_operand.hbm [shape: bf16[16,8,128], index: 5, kind: input, shape index: {}]
  %s6 = inlined_call_operand.hbm [shape: bf16[128,128], index: 6, kind: input, shape index: {}]
  %s7 = inlined_call_operand.vmem [shape: bf16[1,128], index: 7, kind: input, shape index: {}]
  %s8 = inlined_call_operand.hbm [shape: bf16[128,128], index: 8, kind: input, shape index: {}]
  %s9 = inlined_call_operand.hbm [shape: bf16[128,128], index: 9, kind: input, shape index: {}]
  %s10 = inlined_call_operand.hbm [shape: bf16[128,128], index: 10, kind: input, shape index: {}]
  %s11 = inlined_call_operand.vmem [shape: bf16[1,128], index: 11, kind: input, shape index: {}]
  %s12 = inlined_call_operand.hbm [shape: bf16[128,128], index: 12, kind: input, shape index: {}]
  %s13 = inlined_call_operand.vmem [shape: bf16[1,128], index: 13, kind: input, shape index: {}]
  %s14 = inlined_call_operand.hbm [shape: bf16[16,128], index: 14, kind: output, shape index: {}]
  %s15 = sld [smem:[#allocation0]]
  $region121: #{tpu_custom_call.1} parent=0
    _
  %s17 = ssub.s32 1, %s15
  %s18 = scalar_select 0, %s17, %s15
  %19 = sst [smem:[#allocation3]] %s0
  $region1: #{tpu_custom_call.1} parent=0
    #allocation4 [shape = 'u8[4096]{0}', space=vmem, size = 0x1000, scoped, tag = 'input window, operand 1']
    #allocation5 [shape = 's32[2]{0}', space=sflag, size = 0x8, scoped, tag = 'scoped memory for tpu_custom_call.1']
    #allocation6 [shape = 's32[2]{0}', space=sflag, size = 0x8, scoped, tag = 'scoped memory for tpu_custom_call.1']
    #allocation7 [shape = 'u8[4096]{0}', space=vmem, size = 0x1000, scoped, tag = 'input window, operand 2']
    #allocation8 [shape = 's32[2]{0}', space=sflag, size = 0x8, scoped, tag = 'scoped memory for tpu_custom_call.1']
    #allocation9 [shape = 'u8[32768]{0}', space=vmem, size = 0x8000, scoped, tag = 'input window, operand 4']
    #allocation10 [shape = 'u8[32768]{0}', space=vmem, size = 0x8000, scoped, tag = 'input window, operand 5']
    #allocation11 [shape = 's32[2]{0}', space=sflag, size = 0x8, scoped, tag = 'scoped memory for tpu_custom_call.1']
    #allocation12 [shape = 'u8[32768]{0}', space=vmem, size = 0x8000, scoped, tag = 'input window, operand 6, single buffered']
    #allocation13 [shape = 'u8[32768]{0}', space=vmem, size = 0x8000, scoped, tag = 'input window, operand 8, single buffered']
    #allocation14 [shape = 's32[1]{0}', space=sflag, size = 0x4, scoped, tag = 'scoped memory for tpu_custom_call.1']
    #allocation15 [shape = 'u8[32768]{0}', space=vmem, size = 0x8000, scoped, tag = 'input window, operand 9, single buffered']
    #allocation16 [shape = 'u8[32768]{0}', space=vmem, size = 0x8000, scoped, tag = 'input window, operand 10, single buffered']
    #allocation17 [shape = 's32[1]{0}', space=sflag, size = 0x4, scoped, tag = 'scoped memory for tpu_custom_call.1']
    #allocation18 [shape = 'u8[32768]{0}', space=vmem, size = 0x8000, scoped, tag = 'input window, operand 12, single buffered']
    #allocation19 [shape = 'u8[4096]{0}', space=vmem, size = 0x1000, scoped, tag = 'output window, operand 0']
    %20 = vsyncpa [#allocation5], 0
    %s21 = scalar_lea.sflag [#allocation5], 1
    %22 = vsyncpa %s21, 0
    %23 = vsyncpa [#allocation8], 0
    %s24 = scalar_lea.sflag [#allocation8], 1
    %25 = vsyncpa %s24, 0
    %26 = vsyncpa [#allocation11], 0
    %s27 = scalar_lea.sflag [#allocation11], 1
    %28 = vsyncpa %s27, 0
    %29 = vsyncpa [#allocation14], 0
    %30 = vsyncpa [#allocation17], 0
    %31 = vsyncpa [#allocation6], 0
    %s32 = scalar_lea.sflag [#allocation6], 1
    %33 = vsyncpa %s32, 0
    loop: start=0, step=1, limit=4
    $region2: #{tpu_custom_call.1} parent=1 // loop_pre_header
      _
    $region3: #{tpu_custom_call.1} parent=1 // loop_header
      %s35 = sphi 0, %s39
      %p36 = scmp.ge.s32.totalorder %s35, 4
      %s45 = sphi 0, %s47
      %s48 = sphi 0, %s45
      %s49 = sphi 0, %s48
      %s65 = sphi 0, %s49
      %s71 = sphi 0, %s73
      %s74 = sphi 0, %s71
      %s75 = sphi 0, %s74
      %s91 = sphi 0, %s75
      %s97 = sphi 0, %s99
      %s100 = sphi 0, %s97
      %s101 = sphi 0, %s100
      %s117 = sphi 0, %s101
      %s123 = sphi 0, %s125
      %s126 = sphi 0, %s123
      %s127 = sphi 0, %s126
      %s143 = sphi 0, %s127
      %s149 = sphi 0, %s151
      %s152 = sphi 0, %s149
      %s153 = sphi 0, %s152
      %s169 = sphi 0, %s153
      %s173 = sphi 0, %s173
      %s175 = sphi 0, %s173
      %s176 = sphi 0, %s175
      %s190 = sphi 0, %s176
      %s194 = sphi 0, %s194
      %s196 = sphi 0, %s194
      %s197 = sphi 0, %s196
      %s211 = sphi 0, %s197
      %s215 = sphi 0, %s215
      %s217 = sphi 0, %s215
      %s218 = sphi 0, %s217
      %s232 = sphi 0, %s218
      %s236 = sphi 0, %s236
      %s238 = sphi 0, %s236
      %s239 = sphi 0, %s238
      %s253 = sphi 0, %s239
      %s257 = sphi 0, %s257
      %s259 = sphi 0, %s257
      %s260 = sphi 0, %s259
      %s274 = sphi 0, %s260
      %s278 = sphi 0, %s278
      %s280 = sphi 0, %s278
      %s281 = sphi 0, %s280
      %s295 = sphi 0, %s281
      %s299 = sphi 0, %s299
      %s301 = sphi 0, %s299
      %s302 = sphi 0, %s301
      %s316 = sphi 0, %s302
      %s320 = sphi 0, %s320
      %s322 = sphi 0, %s320
      %s323 = sphi 0, %s322
      %s337 = sphi 0, %s323
      %s343 = sphi 0, %s345
      %s346 = sphi 0, %s343
      %s347 = sphi 0, %s346
      %s363 = sphi 0, %s347
    $region4: #{tpu_custom_call.1} parent=1 // loop_header_branch
      %38 = sbr.rel (%p36) target = $region8
    $region5: #{tpu_custom_call.1} parent=1 // loop_body
      %s40 = ssub.s32 %s35, 1
      %s41 = ssub.s32 %s35, 2
      %s42 = sadd.s32 %s35, 1
      %s43 = ssub.s32 %s35, %s42
      %p44 = scmp.eq.s32.totalorder %s43, 0
      %s46 = sadd.s32 %s45, 1
      %s47 = scalar_select %p44, %s45, %s46
      %p50 = pneg %p44
      %p51 = scmp.eq.s32.totalorder %s35, 1
      %p52 = por %p50, %p51
      %p53 = scmp.ne.s32.totalorder %s45, %s48
      %p54 = scmp.eq.s32.totalorder %s35, 0
      %p55 = por %p53, %p54
      %p56 = scmp.ne.s32.totalorder %s45, %s48
      %p57 = scmp.eq.s32.totalorder %s40, 1
      %p58 = por %p56, %p57
      %p59 = scmp.ne.s32.totalorder %s48, %s49
      %p60 = scmp.eq.s32.totalorder %s40, 0
      %p61 = por %p59, %p60
      %p62 = scmp.ne.s32.totalorder %s48, %s49
      %p63 = scmp.eq.s32.totalorder %s41, 1
      %p64 = por %p62, %p63
      %p66 = scmp.ne.s32.totalorder %s49, %s65
      %p67 = scmp.eq.s32.totalorder %s41, 0
      %p68 = por %p66, %p67
      %s69 = ssub.s32 %s35, %s42
      %p70 = scmp.eq.s32.totalorder %s69, 0
      %s72 = sadd.s32 %s71, 1
      %s73 = scalar_select %p70, %s71, %s72
      %p76 = pneg %p70
      %p77 = scmp.eq.s32.totalorder %s35, 1
      %p78 = por %p76, %p77
      %p79 = scmp.ne.s32.totalorder %s71, %s74
      %p80 = scmp.eq.s32.totalorder %s35, 0
      %p81 = por %p79, %p80
      %p82 = scmp.ne.s32.totalorder %s71, %s74
      %p83 = scmp.eq.s32.totalorder %s40, 1
      %p84 = por %p82, %p83
      %p85 = scmp.ne.s32.totalorder %s74, %s75
      %p86 = scmp.eq.s32.totalorder %s40, 0
      %p87 = por %p85, %p86
      %p88 = scmp.ne.s32.totalorder %s74, %s75
      %p89 = scmp.eq.s32.totalorder %s41, 1
      %p90 = por %p88, %p89
      %p92 = scmp.ne.s32.totalorder %s75, %s91
      %p93 = scmp.eq.s32.totalorder %s41, 0
      %p94 = por %p92, %p93
      %s95 = ssub.s32 %s35, %s42
      %p96 = scmp.eq.s32.totalorder %s95, 0
      %s98 = sadd.s32 %s97, 1
      %s99 = scalar_select %p96, %s97, %s98
      %p102 = pneg %p96
      %p103 = scmp.eq.s32.totalorder %s35, 1
      %p104 = por %p102, %p103
      %p105 = scmp.ne.s32.totalorder %s97, %s100
      %p106 = scmp.eq.s32.totalorder %s35, 0
      %p107 = por %p105, %p106
      %p108 = scmp.ne.s32.totalorder %s97, %s100
      %p109 = scmp.eq.s32.totalorder %s40, 1
      %p110 = por %p108, %p109
      %p111 = scmp.ne.s32.totalorder %s100, %s101
      %p112 = scmp.eq.s32.totalorder %s40, 0
      %p113 = por %p111, %p112
      %p114 = scmp.ne.s32.totalorder %s100, %s101
      %p115 = scmp.eq.s32.totalorder %s41, 1
      %p116 = por %p114, %p115
      %p118 = scmp.ne.s32.totalorder %s101, %s117
      %p119 = scmp.eq.s32.totalorder %s41, 0
      %p120 = por %p118, %p119
      %s121 = ssub.s32 %s35, %s42
      %p122 = scmp.eq.s32.totalorder %s121, 0
      %s124 = sadd.s32 %s123, 1
      %s125 = scalar_select %p122, %s123, %s124
      %p128 = pneg %p122
      %p129 = scmp.eq.s32.totalorder %s35, 1
      %p130 = por %p128, %p129
      %p131 = scmp.ne.s32.totalorder %s123, %s126
      %p132 = scmp.eq.s32.totalorder %s35, 0
      %p133 = por %p131, %p132
      %p134 = scmp.ne.s32.totalorder %s123, %s126
      %p135 = scmp.eq.s32.totalorder %s40, 1
      %p136 = por %p134, %p135
      %p137 = scmp.ne.s32.totalorder %s126, %s127
      %p138 = scmp.eq.s32.totalorder %s40, 0
      %p139 = por %p137, %p138
      %p140 = scmp.ne.s32.totalorder %s126, %s127
      %p141 = scmp.eq.s32.totalorder %s41, 1
      %p142 = por %p140, %p141
      %p144 = scmp.ne.s32.totalorder %s127, %s143
      %p145 = scmp.eq.s32.totalorder %s41, 0
      %p146 = por %p144, %p145
      %s147 = ssub.s32 %s35, %s42
      %p148 = scmp.eq.s32.totalorder %s147, 0
      %s150 = sadd.s32 %s149, 1
      %s151 = scalar_select %p148, %s149, %s150
      %p154 = pneg %p148
      %p155 = scmp.eq.s32.totalorder %s35, 1
      %p156 = por %p154, %p155
      %p157 = scmp.ne.s32.totalorder %s149, %s152
      %p158 = scmp.eq.s32.totalorder %s35, 0
      %p159 = por %p157, %p158
      %p160 = scmp.ne.s32.totalorder %s149, %s152
      %p161 = scmp.eq.s32.totalorder %s40, 1
      %p162 = por %p160, %p161
      %p163 = scmp.ne.s32.totalorder %s152, %s153
      %p164 = scmp.eq.s32.totalorder %s40, 0
      %p165 = por %p163, %p164
      %p166 = scmp.ne.s32.totalorder %s152, %s153
      %p167 = scmp.eq.s32.totalorder %s41, 1
      %p168 = por %p166, %p167
      %p170 = scmp.ne.s32.totalorder %s153, %s169
      %p171 = scmp.eq.s32.totalorder %s41, 0
      %p172 = por %p170, %p171
      %s174 = sadd.s32 %s173, 1
      %p177 = scmp.eq.s32.totalorder %s35, 1
      %p178 = scmp.ne.s32.totalorder %s173, %s175
      %p179 = scmp.eq.s32.totalorder %s35, 0
      %p180 = por %p178, %p179
      %p181 = scmp.ne.s32.totalorder %s173, %s175
      %p182 = scmp.eq.s32.totalorder %s40, 1
      %p183 = por %p181, %p182
      %p184 = scmp.ne.s32.totalorder %s175, %s176
      %p185 = scmp.eq.s32.totalorder %s40, 0
      %p186 = por %p184, %p185
      %p187 = scmp.ne.s32.totalorder %s175, %s176
      %p188 = scmp.eq.s32.totalorder %s41, 1
      %p189 = por %p187, %p188
      %p191 = scmp.ne.s32.totalorder %s176, %s190
      %p192 = scmp.eq.s32.totalorder %s41, 0
      %p193 = por %p191, %p192
      %s195 = sadd.s32 %s194, 1
      %p198 = scmp.eq.s32.totalorder %s35, 1
      %p199 = scmp.ne.s32.totalorder %s194, %s196
      %p200 = scmp.eq.s32.totalorder %s35, 0
      %p201 = por %p199, %p200
      %p202 = scmp.ne.s32.totalorder %s194, %s196
      %p203 = scmp.eq.s32.totalorder %s40, 1
      %p204 = por %p202, %p203
      %p205 = scmp.ne.s32.totalorder %s196, %s197
      %p206 = scmp.eq.s32.totalorder %s40, 0
      %p207 = por %p205, %p206
      %p208 = scmp.ne.s32.totalorder %s196, %s197
      %p209 = scmp.eq.s32.totalorder %s41, 1
      %p210 = por %p208, %p209
      %p212 = scmp.ne.s32.totalorder %s197, %s211
      %p213 = scmp.eq.s32.totalorder %s41, 0
      %p214 = por %p212, %p213
      %s216 = sadd.s32 %s215, 1
      %p219 = scmp.eq.s32.totalorder %s35, 1
      %p220 = scmp.ne.s32.totalorder %s215, %s217
      %p221 = scmp.eq.s32.totalorder %s35, 0
      %p222 = por %p220, %p221
      %p223 = scmp.ne.s32.totalorder %s215, %s217
      %p224 = scmp.eq.s32.totalorder %s40, 1
      %p225 = por %p223, %p224
      %p226 = scmp.ne.s32.totalorder %s217, %s218
      %p227 = scmp.eq.s32.totalorder %s40, 0
      %p228 = por %p226, %p227
      %p229 = scmp.ne.s32.totalorder %s217, %s218
      %p230 = scmp.eq.s32.totalorder %s41, 1
      %p231 = por %p229, %p230
      %p233 = scmp.ne.s32.totalorder %s218, %s232
      %p234 = scmp.eq.s32.totalorder %s41, 0
      %p235 = por %p233, %p234
      %s237 = sadd.s32 %s236, 1
      %p240 = scmp.eq.s32.totalorder %s35, 1
      %p241 = scmp.ne.s32.totalorder %s236, %s238
      %p242 = scmp.eq.s32.totalorder %s35, 0
      %p243 = por %p241, %p242
      %p244 = scmp.ne.s32.totalorder %s236, %s238
      %p245 = scmp.eq.s32.totalorder %s40, 1
      %p246 = por %p244, %p245
      %p247 = scmp.ne.s32.totalorder %s238, %s239
      %p248 = scmp.eq.s32.totalorder %s40, 0
      %p249 = por %p247, %p248
      %p250 = scmp.ne.s32.totalorder %s238, %s239
      %p251 = scmp.eq.s32.totalorder %s41, 1
      %p252 = por %p250, %p251
      %p254 = scmp.ne.s32.totalorder %s239, %s253
      %p255 = scmp.eq.s32.totalorder %s41, 0
      %p256 = por %p254, %p255
      %s258 = sadd.s32 %s257, 1
      %p261 = scmp.eq.s32.totalorder %s35, 1
      %p262 = scmp.ne.s32.totalorder %s257, %s259
      %p263 = scmp.eq.s32.totalorder %s35, 0
      %p264 = por %p262, %p263
      %p265 = scmp.ne.s32.totalorder %s257, %s259
      %p266 = scmp.eq.s32.totalorder %s40, 1
      %p267 = por %p265, %p266
      %p268 = scmp.ne.s32.totalorder %s259, %s260
      %p269 = scmp.eq.s32.totalorder %s40, 0
      %p270 = por %p268, %p269
      %p271 = scmp.ne.s32.totalorder %s259, %s260
      %p272 = scmp.eq.s32.totalorder %s41, 1
      %p273 = por %p271, %p272
      %p275 = scmp.ne.s32.totalorder %s260, %s274
      %p276 = scmp.eq.s32.totalorder %s41, 0
      %p277 = por %p275, %p276
      %s279 = sadd.s32 %s278, 1
      %p282 = scmp.eq.s32.totalorder %s35, 1
      %p283 = scmp.ne.s32.totalorder %s278, %s280
      %p284 = scmp.eq.s32.totalorder %s35, 0
      %p285 = por %p283, %p284
      %p286 = scmp.ne.s32.totalorder %s278, %s280
      %p287 = scmp.eq.s32.totalorder %s40, 1
      %p288 = por %p286, %p287
      %p289 = scmp.ne.s32.totalorder %s280, %s281
      %p290 = scmp.eq.s32.totalorder %s40, 0
      %p291 = por %p289, %p290
      %p292 = scmp.ne.s32.totalorder %s280, %s281
      %p293 = scmp.eq.s32.totalorder %s41, 1
      %p294 = por %p292, %p293
      %p296 = scmp.ne.s32.totalorder %s281, %s295
      %p297 = scmp.eq.s32.totalorder %s41, 0
      %p298 = por %p296, %p297
      %s300 = sadd.s32 %s299, 1
      %p303 = scmp.eq.s32.totalorder %s35, 1
      %p304 = scmp.ne.s32.totalorder %s299, %s301
      %p305 = scmp.eq.s32.totalorder %s35, 0
      %p306 = por %p304, %p305
      %p307 = scmp.ne.s32.totalorder %s299, %s301
      %p308 = scmp.eq.s32.totalorder %s40, 1
      %p309 = por %p307, %p308
      %p310 = scmp.ne.s32.totalorder %s301, %s302
      %p311 = scmp.eq.s32.totalorder %s40, 0
      %p312 = por %p310, %p311
      %p313 = scmp.ne.s32.totalorder %s301, %s302
      %p314 = scmp.eq.s32.totalorder %s41, 1
      %p315 = por %p313, %p314
      %p317 = scmp.ne.s32.totalorder %s302, %s316
      %p318 = scmp.eq.s32.totalorder %s41, 0
      %p319 = por %p317, %p318
      %s321 = sadd.s32 %s320, 1
      %p324 = scmp.eq.s32.totalorder %s35, 1
      %p325 = scmp.ne.s32.totalorder %s320, %s322
      %p326 = scmp.eq.s32.totalorder %s35, 0
      %p327 = por %p325, %p326
      %p328 = scmp.ne.s32.totalorder %s320, %s322
      %p329 = scmp.eq.s32.totalorder %s40, 1
      %p330 = por %p328, %p329
      %p331 = scmp.ne.s32.totalorder %s322, %s323
      %p332 = scmp.eq.s32.totalorder %s40, 0
      %p333 = por %p331, %p332
      %p334 = scmp.ne.s32.totalorder %s322, %s323
      %p335 = scmp.eq.s32.totalorder %s41, 1
      %p336 = por %p334, %p335
      %p338 = scmp.ne.s32.totalorder %s323, %s337
      %p339 = scmp.eq.s32.totalorder %s41, 0
      %p340 = por %p338, %p339
      %s341 = ssub.s32 %s35, %s42
      %p342 = scmp.eq.s32.totalorder %s341, 0
      %s344 = sadd.s32 %s343, 1
      %s345 = scalar_select %p342, %s343, %s344
      %p348 = pneg %p342
      %p349 = scmp.eq.s32.totalorder %s35, 1
      %p350 = por %p348, %p349
      %p351 = scmp.ne.s32.totalorder %s343, %s346
      %p352 = scmp.eq.s32.totalorder %s35, 0
      %p353 = por %p351, %p352
      %p354 = scmp.ne.s32.totalorder %s343, %s346
      %p355 = scmp.eq.s32.totalorder %s40, 1
      %p356 = por %p354, %p355
      %p357 = scmp.ne.s32.totalorder %s346, %s347
      %p358 = scmp.eq.s32.totalorder %s40, 0
      %p359 = por %p357, %p358
      %p360 = scmp.ne.s32.totalorder %s346, %s347
      %p361 = scmp.eq.s32.totalorder %s41, 1
      %p362 = por %p360, %p361
      %p364 = scmp.ne.s32.totalorder %s347, %s363
      %p365 = scmp.eq.s32.totalorder %s41, 0
      %p366 = por %p364, %p365
      %p367 = scmp.le.s32.totalorder 1, %s35
      %p368 = scmp.lt.s32.totalorder %s35, 3
      %p369 = pnand %p367, %p368
      %p370 = pneg %p369
      // Predicated region
      $region9: #{tpu_custom_call.1} parent=5 // pred_check
        _
      $region10: #{tpu_custom_call.1} parent=5 // pred_check_branch
        %372 = sbr.rel (%p369) target = $region12
      $region11: #{tpu_custom_call.1} parent=5 // pred_region
        %s373 = ssub.s32 %s35, 1
        // Predicated region
        $region13: #{tpu_custom_call.1} parent=11 // pred_check
          %p374 = pneg %p186
        $region14: #{tpu_custom_call.1} parent=11 // pred_check_branch
          %376 = sbr.rel (%p374) target = $region16
        $region15: #{tpu_custom_call.1} parent=11 // pred_region
          %s378 = ssub.s32 1024, 1024
          %379 = vsyncadd [#allocation11], %s378
          %s380 = sshll.u32 [#allocation12], 4
          %s381 = int_to_ptr.vmem [resolvable:$true] %s380
          %386 = dma.hbm_to_vmem [thread:$0]  %s6, 1024, %s381, [#allocation11], 64, 64, 4
        $region16: #{tpu_custom_call.1} parent=11 // pred_fallthru
          _
        // Predicated region
        $region17: #{tpu_custom_call.1} parent=11 // pred_check
          %p387 = pneg %p207
        $region18: #{tpu_custom_call.1} parent=11 // pred_check_branch
          %389 = sbr.rel (%p387) target = $region20
        $region19: #{tpu_custom_call.1} parent=11 // pred_region
          _
        $region20: #{tpu_custom_call.1} parent=11 // pred_fallthru
          _
        // Predicated region
        $region21: #{tpu_custom_call.1} parent=11 // pred_check
          %p390 = pneg %p228
        $region22: #{tpu_custom_call.1} parent=11 // pred_check_branch
          %392 = sbr.rel (%p390) target = $region24
        $region23: #{tpu_custom_call.1} parent=11 // pred_region
          %s394 = ssub.s32 1024, 1024
          %395 = vsyncadd [#allocation14], %s394
          %s396 = sshll.u32 [#allocation13], 4
          %s397 = int_to_ptr.vmem [resolvable:$true] %s396
          %402 = dma.hbm_to_vmem [thread:$0]  %s8, 1024, %s397, [#allocation14], 64, 64, 4
        $region24: #{tpu_custom_call.1} parent=11 // pred_fallthru
          _
        // Predicated region
        $region25: #{tpu_custom_call.1} parent=11 // pred_check
          %p403 = pneg %p249
        $region26: #{tpu_custom_call.1} parent=11 // pred_check_branch
          %405 = sbr.rel (%p403) target = $region28
        $region27: #{tpu_custom_call.1} parent=11 // pred_region
          %s407 = ssub.s32 1024, 1024
          %408 = vsyncadd [#allocation14], %s407
          %s409 = sshll.u32 [#allocation15], 4
          %s410 = int_to_ptr.vmem [resolvable:$true] %s409
          %415 = dma.hbm_to_vmem [thread:$0]  %s9, 1024, %s410, [#allocation14], 64, 64, 4
        $region28: #{tpu_custom_call.1} parent=11 // pred_fallthru
          _
        // Predicated region
        $region29: #{tpu_custom_call.1} parent=11 // pred_check
          %p416 = pneg %p270
        $region30: #{tpu_custom_call.1} parent=11 // pred_check_branch
          %418 = sbr.rel (%p416) target = $region32
        $region31: #{tpu_custom_call.1} parent=11 // pred_region
          %s420 = ssub.s32 1024, 1024
          %421 = vsyncadd [#allocation17], %s420
          %s422 = sshll.u32 [#allocation16], 4
          %s423 = int_to_ptr.vmem [resolvable:$true] %s422
          %428 = dma.hbm_to_vmem [thread:$0]  %s10, 1024, %s423, [#allocation17], 64, 64, 4
        $region32: #{tpu_custom_call.1} parent=11 // pred_fallthru
          _
        // Predicated region
        $region33: #{tpu_custom_call.1} parent=11 // pred_check
          %p429 = pneg %p291
        $region34: #{tpu_custom_call.1} parent=11 // pred_check_branch
          %431 = sbr.rel (%p429) target = $region36
        $region35: #{tpu_custom_call.1} parent=11 // pred_region
          _
        $region36: #{tpu_custom_call.1} parent=11 // pred_fallthru
          _
        // Predicated region
        $region37: #{tpu_custom_call.1} parent=11 // pred_check
          %p432 = pneg %p312
        $region38: #{tpu_custom_call.1} parent=11 // pred_check_branch
          %434 = sbr.rel (%p432) target = $region40
        $region39: #{tpu_custom_call.1} parent=11 // pred_region
          %s436 = ssub.s32 1024, 1024
          %437 = vsyncadd [#allocation17], %s436
          %s438 = sshll.u32 [#allocation18], 4
          %s439 = int_to_ptr.vmem [resolvable:$true] %s438
          %444 = dma.hbm_to_vmem [thread:$0]  %s12, 1024, %s439, [#allocation17], 64, 64, 4
        $region40: #{tpu_custom_call.1} parent=11 // pred_fallthru
          _
        // Predicated region
        $region41: #{tpu_custom_call.1} parent=11 // pred_check
          %p445 = pneg %p333
        $region42: #{tpu_custom_call.1} parent=11 // pred_check_branch
          %447 = sbr.rel (%p445) target = $region44
        $region43: #{tpu_custom_call.1} parent=11 // pred_region
          _
        $region44: #{tpu_custom_call.1} parent=11 // pred_fallthru
          _
      $region12: #{tpu_custom_call.1} parent=5 // pred_fallthru
        _
      %p448 = scmp.lt.s32.totalorder %s35, 2
      // Predicated region
      $region45: #{tpu_custom_call.1} parent=5 // pred_check
        %p449 = pneg %p448
      $region46: #{tpu_custom_call.1} parent=5 // pred_check_branch
        %451 = sbr.rel (%p449) target = $region48
      $region47: #{tpu_custom_call.1} parent=5 // pred_region
        // Predicated region
        $region49: #{tpu_custom_call.1} parent=47 // pred_check
          %p452 = pneg %p55
        $region50: #{tpu_custom_call.1} parent=47 // pred_check_branch
          %454 = sbr.rel (%p452) target = $region52
        $region51: #{tpu_custom_call.1} parent=47 // pred_region
          %s455 = sand.u32 %s45, 1
          %s456 = scalar_lea.sflag [#allocation5], %s455
          %s457 = sand.u32 %s45, 1
          %s458 = smul.addr %s457, 4
          %s459 = scalar_lea.vmem [#allocation4], %s458
          %s461 = ssub.s32 64, 64
          %462 = vsyncadd %s456, %s461
          %s463 = smul.addr %s35, 64
          %s464 = scalar_lea.hbm %s1, %s463
          %s466 = sshll.u32 %s459, 4
          %s467 = int_to_ptr.vmem [resolvable:$true] %s466
          %469 = dma.hbm_to_vmem [thread:$0]  %s464, 64, %s467, %s456
        $region52: #{tpu_custom_call.1} parent=47 // pred_fallthru
          _
        // Predicated region
        $region53: #{tpu_custom_call.1} parent=47 // pred_check
          %p470 = pneg %p81
        $region54: #{tpu_custom_call.1} parent=47 // pred_check_branch
          %472 = sbr.rel (%p470) target = $region56
        $region55: #{tpu_custom_call.1} parent=47 // pred_region
          %s473 = sand.u32 %s35, 1
          %s474 = scalar_lea.sflag [#allocation8], %s473
          %s475 = sand.u32 %s71, 1
          %s476 = smul.addr %s475, 4
          %s477 = scalar_lea.vmem [#allocation7], %s476
          %s479 = ssub.s32 64, 64
          %480 = vsyncadd %s474, %s479
          %s481 = smul.addr %s35, 64
          %s482 = scalar_lea.hbm %s2, %s481
          %s484 = sshll.u32 %s477, 4
          %s485 = int_to_ptr.vmem [resolvable:$true] %s484
          %487 = dma.hbm_to_vmem [thread:$0]  %s482, 64, %s485, %s474
        $region56: #{tpu_custom_call.1} parent=47 // pred_fallthru
          _
        // Predicated region
        $region57: #{tpu_custom_call.1} parent=47 // pred_check
          %p488 = pneg %p107
        $region58: #{tpu_custom_call.1} parent=47 // pred_check_branch
          %490 = sbr.rel (%p488) target = $region60
        $region59: #{tpu_custom_call.1} parent=47 // pred_region
          %p491 = scmp.lt.s32.totalorder %s35, 1
          %s492 = scalar_select %p491, %s35, 1
          %s493 = smul.addr %s492, 4
          %s494 = scalar_lea.vmem %s3, %s493
        $region60: #{tpu_custom_call.1} parent=47 // pred_fallthru
          _
        // Predicated region
        $region61: #{tpu_custom_call.1} parent=47 // pred_check
          %p495 = pneg %p133
        $region62: #{tpu_custom_call.1} parent=47 // pred_check_branch
          %497 = sbr.rel (%p495) target = $region64
        $region63: #{tpu_custom_call.1} parent=47 // pred_region
          %s498 = sand.u32 %s35, 1
          %s499 = scalar_lea.sflag [#allocation8], %s498
          %s500 = sand.u32 %s123, 1
          %s501 = smul.addr %s500, 32
          %s502 = scalar_lea.vmem [#allocation9], %s501
          %s503 = smul.u32 8, %s35
          %s505 = ssub.s32 512, 512
          %506 = vsyncadd %s499, %s505
          %s507 = smul.addr %s503, 64
          %s508 = scalar_lea.hbm %s4, %s507
          %s509 = sshll.u32 %s502, 4
          %s510 = int_to_ptr.vmem [resolvable:$true] %s509
          %515 = dma.hbm_to_vmem [thread:$0]  %s508, 512, %s510, %s499, 64, 64, 4
        $region64: #{tpu_custom_call.1} parent=47 // pred_fallthru
          _
        // Predicated region
        $region65: #{tpu_custom_call.1} parent=47 // pred_check
          %p516 = pneg %p159
        $region66: #{tpu_custom_call.1} parent=47 // pred_check_branch
          %518 = sbr.rel (%p516) target = $region68
        $region67: #{tpu_custom_call.1} parent=47 // pred_region
          %s519 = sand.u32 %s35, 1
          %s520 = scalar_lea.sflag [#allocation11], %s519
          %s521 = sand.u32 %s149, 1
          %s522 = smul.addr %s521, 32
          %s523 = scalar_lea.vmem [#allocation10], %s522
          %s524 = smul.u32 8, %s35
          %s526 = ssub.s32 512, 512
          %527 = vsyncadd %s520, %s526
          %s528 = smul.addr %s524, 64
          %s529 = scalar_lea.hbm %s5, %s528
          %s530 = sshll.u32 %s523, 4
          %s531 = int_to_ptr.vmem [resolvable:$true] %s530
          %536 = dma.hbm_to_vmem [thread:$0]  %s529, 512, %s531, %s520, 64, 64, 4
        $region68: #{tpu_custom_call.1} parent=47 // pred_fallthru
          _
      $region48: #{tpu_custom_call.1} parent=5 // pred_fallthru
        _
      %p537 = scmp.le.s32.totalorder 1, %s35
      %p538 = scmp.lt.s32.totalorder %s35, 3
      %p539 = pnand %p537, %p538
      %p540 = pneg %p539
      // Predicated region
      $region69: #{tpu_custom_call.1} parent=5 // pred_check
        _
      $region70: #{tpu_custom_call.1} parent=5 // pred_check_branch
        %542 = sbr.rel (%p539) target = $region72
      $region71: #{tpu_custom_call.1} parent=5 // pred_region
        %s543 = ssub.s32 %s35, 1
        %s544 = sand.u32 %s48, 1
        %s545 = scalar_lea.sflag [#allocation5], %s544
        %s546 = sand.u32 %s48, 1
        %s547 = smul.addr %s546, 4
        %s548 = scalar_lea.vmem [#allocation4], %s547
        // Predicated region
        $region73: #{tpu_custom_call.1} parent=71 // pred_check
          %p549 = pneg %p61
        $region74: #{tpu_custom_call.1} parent=71 // pred_check_branch
          %551 = sbr.rel (%p549) target = $region76
        $region75: #{tpu_custom_call.1} parent=71 // pred_region
          %552 = dma.done %s545, 64
        $region76: #{tpu_custom_call.1} parent=71 // pred_fallthru
          _
        %s553 = sand.u32 %s40, 1
        %s554 = scalar_lea.sflag [#allocation8], %s553
        %s555 = sand.u32 %s74, 1
        %s556 = smul.addr %s555, 4
        %s557 = scalar_lea.vmem [#allocation7], %s556
        // Predicated region
        $region77: #{tpu_custom_call.1} parent=71 // pred_check
          %p558 = pneg %p87
        $region78: #{tpu_custom_call.1} parent=71 // pred_check_branch
          %560 = sbr.rel (%p558) target = $region80
        $region79: #{tpu_custom_call.1} parent=71 // pred_region
          %561 = dma.done %s554, 64
        $region80: #{tpu_custom_call.1} parent=71 // pred_fallthru
          _
        %s562 = sand.u32 %s40, 1
        %s563 = scalar_lea.sflag [#allocation8], %s562
        %s564 = sand.u32 %s126, 1
        %s565 = smul.addr %s564, 32
        %s566 = scalar_lea.vmem [#allocation9], %s565
        // Predicated region
        $region81: #{tpu_custom_call.1} parent=71 // pred_check
          %p567 = pneg %p139
        $region82: #{tpu_custom_call.1} parent=71 // pred_check_branch
          %569 = sbr.rel (%p567) target = $region84
        $region83: #{tpu_custom_call.1} parent=71 // pred_region
          %570 = dma.done %s563, 512
        $region84: #{tpu_custom_call.1} parent=71 // pred_fallthru
          _
        %s571 = sand.u32 %s40, 1
        %s572 = scalar_lea.sflag [#allocation11], %s571
        %s573 = sand.u32 %s152, 1
        %s574 = smul.addr %s573, 32
        %s575 = scalar_lea.vmem [#allocation10], %s574
        // Predicated region
        $region85: #{tpu_custom_call.1} parent=71 // pred_check
          %p576 = pneg %p165
        $region86: #{tpu_custom_call.1} parent=71 // pred_check_branch
          %578 = sbr.rel (%p576) target = $region88
        $region87: #{tpu_custom_call.1} parent=71 // pred_region
          %579 = dma.done %s572, 512
        $region88: #{tpu_custom_call.1} parent=71 // pred_fallthru
          _
        // Predicated region
        $region89: #{tpu_custom_call.1} parent=71 // pred_check
          %p580 = pneg %p186
        $region90: #{tpu_custom_call.1} parent=71 // pred_check_branch
          %582 = sbr.rel (%p580) target = $region92
        $region91: #{tpu_custom_call.1} parent=71 // pred_region
          %583 = dma.done [#allocation11], 1024
        $region92: #{tpu_custom_call.1} parent=71 // pred_fallthru
          _
        // Predicated region
        $region93: #{tpu_custom_call.1} parent=71 // pred_check
          %p584 = pneg %p228
        $region94: #{tpu_custom_call.1} parent=71 // pred_check_branch
          %586 = sbr.rel (%p584) target = $region96
        $region95: #{tpu_custom_call.1} parent=71 // pred_region
          %587 = dma.done [#allocation14], 1024
        $region96: #{tpu_custom_call.1} parent=71 // pred_fallthru
          _
        // Predicated region
        $region97: #{tpu_custom_call.1} parent=71 // pred_check
          %p588 = pneg %p249
        $region98: #{tpu_custom_call.1} parent=71 // pred_check_branch
          %590 = sbr.rel (%p588) target = $region100
        $region99: #{tpu_custom_call.1} parent=71 // pred_region
          %591 = dma.done [#allocation14], 1024
        $region100: #{tpu_custom_call.1} parent=71 // pred_fallthru
          _
        // Predicated region
        $region101: #{tpu_custom_call.1} parent=71 // pred_check
          %p592 = pneg %p270
        $region102: #{tpu_custom_call.1} parent=71 // pred_check_branch
          %594 = sbr.rel (%p592) target = $region104
        $region103: #{tpu_custom_call.1} parent=71 // pred_region
          %595 = dma.done [#allocation17], 1024
        $region104: #{tpu_custom_call.1} parent=71 // pred_fallthru
          _
        // Predicated region
        $region105: #{tpu_custom_call.1} parent=71 // pred_check
          %p596 = pneg %p312
        $region106: #{tpu_custom_call.1} parent=71 // pred_check_branch
          %598 = sbr.rel (%p596) target = $region108
        $region107: #{tpu_custom_call.1} parent=71 // pred_region
          %599 = dma.done [#allocation17], 1024
        $region108: #{tpu_custom_call.1} parent=71 // pred_fallthru
          _
        %s600 = sand.u32 %s48, 1
        %s601 = scalar_lea.sflag [#allocation5], %s600
        %s602 = sand.u32 %s48, 1
        %s603 = smul.addr %s602, 4
        %s604 = scalar_lea.vmem [#allocation4], %s603
        %p605 = pneg %p61
        %p606 = pneg %p58
        %s607 = sand.u32 %s40, 1
        %s608 = scalar_lea.sflag [#allocation8], %s607
        %s609 = sand.u32 %s74, 1
        %s610 = smul.addr %s609, 4
        %s611 = scalar_lea.vmem [#allocation7], %s610
        %p612 = pneg %p87
        %p613 = pneg %p84
        %p614 = scmp.lt.s32.totalorder %s40, 1
        %s615 = scalar_select %p614, %s40, 1
        %s616 = smul.addr %s615, 4
        %s617 = scalar_lea.vmem %s3, %s616
        %p618 = pneg %p113
        %p619 = pneg %p110
        %s620 = sand.u32 %s40, 1
        %s621 = scalar_lea.sflag [#allocation8], %s620
        %s622 = sand.u32 %s126, 1
        %s623 = smul.addr %s622, 32
        %s624 = scalar_lea.vmem [#allocation9], %s623
        %p625 = pneg %p139
        %p626 = pneg %p136
        %s627 = sand.u32 %s40, 1
        %s628 = scalar_lea.sflag [#allocation11], %s627
        %s629 = sand.u32 %s152, 1
        %s630 = smul.addr %s629, 32
        %s631 = scalar_lea.vmem [#allocation10], %s630
        %p632 = pneg %p165
        %p633 = pneg %p162
        %p634 = pneg %p186
        %p635 = pneg %p183
        %p636 = pneg %p207
        %p637 = pneg %p204
        %p638 = pneg %p228
        %p639 = pneg %p225
        %p640 = pneg %p249
        %p641 = pneg %p246
        %p642 = pneg %p270
        %p643 = pneg %p267
        %p644 = pneg %p291
        %p645 = pneg %p288
        %p646 = pneg %p312
        %p647 = pneg %p309
        %p648 = pneg %p333
        %p649 = pneg %p330
        %p650 = pneg %p359
        %p651 = pneg %p356
        %s652 = sand.u32 %s346, 1
        %s653 = scalar_lea.sflag [#allocation6], %s652
        %s654 = sand.u32 %s346, 1
        %s655 = smul.addr %s654, 4
        %s656 = scalar_lea.vmem [#allocation19], %s655
        %p657 = scmp.lt.s32.totalorder %s40, 1
        %s658 = scalar_select %p657, %s40, 1
        %s659 = smul.addr %s658, 4
        %s660 = scalar_lea.vmem %s3, %s659
        %s661 = smul.u32 8, %s40
        %s662 = smul.u32 8, %s40
        %v664 = vld [vmem:[%s548] sm:$0xf]
        %v665 = vld [vmem:[%s557] sm:$0xf]
        %v666 = vld [vmem:[%s660] sm:$0xf]
        %v667 = vld [vmem:[#allocation12] sm:$0xf]
        %v668 = vld [vmem:[#allocation12 + $0x4] sm:$0xf]
        %v669 = vld [vmem:[#allocation12 + $0x8] sm:$0xf]
        %v670 = vld [vmem:[#allocation12 + $0xc] sm:$0xf]
        %v671 = vld [vmem:[#allocation12 + $0x10] sm:$0xf]
        %v672 = vld [vmem:[#allocation12 + $0x14] sm:$0xf]
        %v673 = vld [vmem:[#allocation12 + $0x18] sm:$0xf]
        %v674 = vld [vmem:[#allocation12 + $0x1c] sm:$0xf]
        %v675 = vld [vmem:[#allocation12 + $0x20] sm:$0xf]
        %v676 = vld [vmem:[#allocation12 + $0x24] sm:$0xf]
        %v677 = vld [vmem:[#allocation12 + $0x28] sm:$0xf]
        %v678 = vld [vmem:[#allocation12 + $0x2c] sm:$0xf]
        %v679 = vld [vmem:[#allocation12 + $0x30] sm:$0xf]
        %v680 = vld [vmem:[#allocation12 + $0x34] sm:$0xf]
        %v681 = vld [vmem:[#allocation12 + $0x38] sm:$0xf]
        %v682 = vld [vmem:[#allocation12 + $0x3c] sm:$0xf]
        %v683 = vld [vmem:[%s7] sm:$0x1]
        %v684 = vunpack.c.l.bf16 %v683
        %v685 = vlaneseq
        %v686 = vshrl.u32 %v685, 7
        %v687 = vsub.s32 0, %v686
        %v688 = vrot.slane %v684, %v687
        %v705 = vunpack.c.l.b16 %v667
        %v706 = vunpack.c.l.b16 %v668
        %v707 = vunpack.c.l.b16 %v669
        %v708 = vunpack.c.l.b16 %v670
        %v709 = vunpack.c.l.b16 %v671
        %v710 = vunpack.c.l.b16 %v672
        %v711 = vunpack.c.l.b16 %v673
        %v712 = vunpack.c.l.b16 %v674
        %v713 = vunpack.c.l.b16 %v675
        %v714 = vunpack.c.l.b16 %v676
        %v715 = vunpack.c.l.b16 %v677
        %v716 = vunpack.c.l.b16 %v678
        %v717 = vunpack.c.l.b16 %v679
        %v718 = vunpack.c.l.b16 %v680
        %v719 = vunpack.c.l.b16 %v681
        %v720 = vunpack.c.l.b16 %v682
        %v721 = vpack.c.b16 %v706, %v705
        %v722 = vpack.c.b16 %v708, %v707
        %v723 = vpack.c.b16 %v710, %v709
        %v724 = vpack.c.b16 %v712, %v711
        %v725 = vpack.c.b16 %v714, %v713
        %v726 = vpack.c.b16 %v716, %v715
        %v727 = vpack.c.b16 %v718, %v717
        %v728 = vpack.c.b16 %v720, %v719
        %737 = vmatprep.subr.bf16.mxu0 0
        %738 = vmatpush1.bf16.msra.mxu0 %v721
        %739 = vmatprep.subr.bf16.mxu0 0
        %740 = vmatpush1.bf16.msra.mxu0 %v722
        %741 = vmatprep.subr.bf16.mxu0 0
        %742 = vmatpush1.bf16.msra.mxu0 %v723
        %743 = vmatprep.subr.bf16.mxu0 0
        %744 = vmatpush1.bf16.msra.mxu0 %v724
        %745 = vmatprep.subr.bf16.mxu0 0
        %746 = vmatpush1.bf16.msra.mxu0 %v725
        %747 = vmatprep.subr.bf16.mxu0 0
        %748 = vmatpush1.bf16.msra.mxu0 %v726
        %749 = vmatprep.subr.bf16.mxu0 0
        %750 = vmatpush1.bf16.msra.mxu0 %v727
        %751 = vmatprep.subr.bf16.mxu0 0
        %752 = vmatpush1.bf16.msra.mxu0 %v728
        %753 = vmatprep.subr.bf16.mxu0 0
        %754 = vmatpush1.bf16.msra.mxu0 0
        %755 = vmatprep.subr.bf16.mxu0 0
        %756 = vmatpush1.bf16.msra.mxu0 0
        %757 = vmatprep.subr.bf16.mxu0 0
        %758 = vmatpush1.bf16.msra.mxu0 0
        %759 = vmatprep.subr.bf16.mxu0 0
        %760 = vmatpush1.bf16.msra.mxu0 0
        %761 = vmatprep.subr.bf16.mxu0 0
        %762 = vmatpush1.bf16.msra.mxu0 0
        %763 = vmatprep.subr.bf16.mxu0 0
        %764 = vmatpush1.bf16.msra.mxu0 0
        %765 = vmatprep.subr.bf16.mxu0 0
        %766 = vmatpush1.bf16.msra.mxu0 0
        %767 = vmatprep.subr.bf16.mxu0 0
        %768 = vmatpush1.bf16.msra.mxu0 0
        %769 = vmatprep.mubr.bf16.mxu0 0
        %770 = vmatmul.mubr.bf16.gmra.mrb[0].mxu0 %v666
        %v771 = vpop.f32.mrb[0].mxu0
        %v772 = vadd.f32 %v688, %v771
        %v773 = vpop.f32.mrb[0].mxu0
        %v774 = vpop.f32.mrb[0].mxu0
        %v775 = vpop.f32.mrb[0].mxu0
        %776 = vdwg.mxu0
        %v777 = vpack.c.bf16 %v772, %v772
        %v778 = vld [vmem:[%s566] sm:$0xf]
        %v779 = vld [vmem:[%s566 + $0x4] sm:$0xf]
        %v780 = vld [vmem:[%s566 + $0x8] sm:$0xf]
        %v781 = vld [vmem:[%s566 + $0xc] sm:$0xf]
        %v782 = vld [vmem:[%s566 + $0x10] sm:$0xf]
        %v783 = vld [vmem:[%s566 + $0x14] sm:$0xf]
        %v784 = vld [vmem:[%s566 + $0x18] sm:$0xf]
        %v785 = vld [vmem:[%s566 + $0x1c] sm:$0xf]
        %v788 = vunpack.c.l.s4 1966171168
        %v789 = vunpack.c.0.s8 %v788
        %v790 = vlaneseq
        %v791 = vshrl.u32 %v790, 7
        %v792 = vsub.s32 %v789, %v791
        %v793 = vrot.slane %v777, %v792
        %v794 = vcombine.high %v793, %v793
        %v796 = vunpack.c.l.s4 1966171168
        %v797 = vunpack.c.0.s8 %v796
        %v798 = vlaneseq
        %v799 = vshrl.u32 %v798, 7
        %v800 = vsub.s32 %v797, %v799
        %v801 = vrot.slane %v793, %v800
        %v803 = vunpack.c.l.s4 1966171168
        %v804 = vunpack.c.0.s8 %v803
        %v805 = vlaneseq
        %v806 = vshrl.u32 %v805, 7
        %v807 = vsub.s32 %v804, %v806
        %v808 = vrot.slane %v794, %v807
        %v809 = vcombine.high %v801, %v801
        %v810 = vcombine.high %v808, %v808
        %v811 = vunpack.i.l.s16 %v801
        %v812 = vunpack.i.h.s16 %v801
        %v813 = vunpack.i.l.s16 %v808
        %v814 = vunpack.i.h.s16 %v808
        %v815 = vunpack.i.l.s16 %v809
        %v816 = vunpack.i.h.s16 %v809
        %v817 = vunpack.i.l.s16 %v810
        %v818 = vunpack.i.h.s16 %v810
        %v819 = vpack.i.b16 %v811, %v811
        %v820 = vpack.i.b16 %v812, %v812
        %v821 = vpack.i.b16 %v813, %v813
        %v822 = vpack.i.b16 %v814, %v814
        %v823 = vpack.i.b16 %v815, %v815
        %v824 = vpack.i.b16 %v816, %v816
        %v825 = vpack.i.b16 %v817, %v817
        %v826 = vpack.i.b16 %v818, %v818
        %v827 = vlaneseq
        %v828 = vshrl.u32 %v827, 7
        %v829 = vsub.s32 0, %v828
        %v830 = vrot.slane %v819, %v829
        %v831 = vlaneseq
        %v832 = vshrl.u32 %v831, 7
        %v833 = vsub.s32 0, %v832
        %v834 = vrot.slane %v820, %v833
        %v835 = vlaneseq
        %v836 = vshrl.u32 %v835, 7
        %v837 = vsub.s32 0, %v836
        %v838 = vrot.slane %v821, %v837
        %v839 = vlaneseq
        %v840 = vshrl.u32 %v839, 7
        %v841 = vsub.s32 0, %v840
        %v842 = vrot.slane %v822, %v841
        %v843 = vlaneseq
        %v844 = vshrl.u32 %v843, 7
        %v845 = vsub.s32 0, %v844
        %v846 = vrot.slane %v823, %v845
        %v847 = vlaneseq
        %v848 = vshrl.u32 %v847, 7
        %v849 = vsub.s32 0, %v848
        %v850 = vrot.slane %v824, %v849
        %v851 = vlaneseq
        %v852 = vshrl.u32 %v851, 7
        %v853 = vsub.s32 0, %v852
        %v854 = vrot.slane %v825, %v853
        %v855 = vlaneseq
        %v856 = vshrl.u32 %v855, 7
        %v857 = vsub.s32 0, %v856
        %v858 = vrot.slane %v826, %v857
        %v860 = vpack.i.b16 %v830, %v830
        %v862 = vlaneseq
        %v863 = vshrl.u32 %v862, 7
        %v864 = vsub.s32 0, %v863
        %v865 = vrot.slane %v860, %v864
        %v867 = vpack.i.b16 %v834, %v834
        %v869 = vlaneseq
        %v870 = vshrl.u32 %v869, 7
        %v871 = vsub.s32 0, %v870
        %v872 = vrot.slane %v867, %v871
        %v874 = vpack.i.b16 %v838, %v838
        %v876 = vlaneseq
        %v877 = vshrl.u32 %v876, 7
        %v878 = vsub.s32 0, %v877
        %v879 = vrot.slane %v874, %v878
        %v881 = vpack.i.b16 %v842, %v842
        %v883 = vlaneseq
        %v884 = vshrl.u32 %v883, 7
        %v885 = vsub.s32 0, %v884
        %v886 = vrot.slane %v881, %v885
        %v888 = vpack.i.b16 %v846, %v846
        %v890 = vlaneseq
        %v891 = vshrl.u32 %v890, 7
        %v892 = vsub.s32 0, %v891
        %v893 = vrot.slane %v888, %v892
        %v895 = vpack.i.b16 %v850, %v850
        %v897 = vlaneseq
        %v898 = vshrl.u32 %v897, 7
        %v899 = vsub.s32 0, %v898
        %v900 = vrot.slane %v895, %v899
        %v902 = vpack.i.b16 %v854, %v854
        %v904 = vlaneseq
        %v905 = vshrl.u32 %v904, 7
        %v906 = vsub.s32 0, %v905
        %v907 = vrot.slane %v902, %v906
        %v909 = vpack.i.b16 %v858, %v858
        %v911 = vlaneseq
        %v912 = vshrl.u32 %v911, 7
        %v913 = vsub.s32 0, %v912
        %v914 = vrot.slane %v909, %v913
        %v915 = vmul.bf16 %v778, %v865
        %v916 = vmul.bf16 %v779, %v872
        %v917 = vmul.bf16 %v780, %v879
        %v918 = vmul.bf16 %v781, %v886
        %v919 = vmul.bf16 %v782, %v893
        %v920 = vmul.bf16 %v783, %v900
        %v921 = vmul.bf16 %v784, %v907
        %v922 = vmul.bf16 %v785, %v914
        %v923 = vunpack.c.l.bf16 %v915
        %v924 = vunpack.c.l.bf16 %v916
        %v925 = vunpack.c.l.bf16 %v917
        %v926 = vunpack.c.l.bf16 %v918
        %v927 = vunpack.c.l.bf16 %v919
        %v928 = vunpack.c.l.bf16 %v920
        %v929 = vunpack.c.l.bf16 %v921
        %v930 = vunpack.c.l.bf16 %v922
        %931 = vadd.xlane.f32.xlu0 %v923
        %v932 = vpop.xlane.xlu0 %931
        %933 = vadd.xlane.f32.xlu0 %v924
        %v934 = vpop.xlane.xlu0 %933
        %935 = vadd.xlane.f32.xlu0 %v925
        %v936 = vpop.xlane.xlu0 %935
        %937 = vadd.xlane.f32.xlu0 %v926
        %v938 = vpop.xlane.xlu0 %937
        %939 = vadd.xlane.f32.xlu0 %v927
        %v940 = vpop.xlane.xlu0 %939
        %941 = vadd.xlane.f32.xlu0 %v928
        %v942 = vpop.xlane.xlu0 %941
        %943 = vadd.xlane.f32.xlu0 %v929
        %v944 = vpop.xlane.xlu0 %943
        %945 = vadd.xlane.f32.xlu0 %v930
        %v946 = vpop.xlane.xlu0 %945
        %s947 = sld [smem:[#allocation3]]
        %v948 = vlaneseq
        %v949 = vand.u32 %v948, 127
        %v950 = vstv %s947
        %vm951 = vcmp.lt.s32.totalorder %v949, %v950
        %v960 = vlaneseq
        %v961 = vshrl.u32 %v960, 7
        %v962 = vsub.s32 %v949, %v961
        %v963 = vrot.slane %v932, %v962
        %v964 = vlaneseq
        %v965 = vshrl.u32 %v964, 7
        %v966 = vsub.s32 %v949, %v965
        %v967 = vrot.slane %v934, %v966
        %v968 = vlaneseq
        %v969 = vshrl.u32 %v968, 7
        %v970 = vsub.s32 %v949, %v969
        %v971 = vrot.slane %v936, %v970
        %v972 = vlaneseq
        %v973 = vshrl.u32 %v972, 7
        %v974 = vsub.s32 %v949, %v973
        %v975 = vrot.slane %v938, %v974
        %v976 = vlaneseq
        %v977 = vshrl.u32 %v976, 7
        %v978 = vsub.s32 %v949, %v977
        %v979 = vrot.slane %v940, %v978
        %v980 = vlaneseq
        %v981 = vshrl.u32 %v980, 7
        %v982 = vsub.s32 %v949, %v981
        %v983 = vrot.slane %v942, %v982
        %v984 = vlaneseq
        %v985 = vshrl.u32 %v984, 7
        %v986 = vsub.s32 %v949, %v985
        %v987 = vrot.slane %v944, %v986
        %v988 = vlaneseq
        %v989 = vshrl.u32 %v988, 7
        %v990 = vsub.s32 %v949, %v989
        %v991 = vrot.slane %v946, %v990
        %vm992 = vcmask 1041409
        %v993 = vsel %vm992, %v967, %v963
        %vm994 = vcmask 1042434
        %v995 = vsel %vm994, %v971, %v993
        %vm996 = vcmask 1043459
        %v997 = vsel %vm996, %v975, %v995
        %vm998 = vcmask 1044484
        %v999 = vsel %vm998, %v979, %v997
        %vm1000 = vcmask 1045509
        %v1001 = vsel %vm1000, %v983, %v999
        %vm1002 = vcmask 1046534
        %v1003 = vsel %vm1002, %v987, %v1001
        %vm1004 = vcmask 1047559
        %v1005 = vsel %vm1004, %v991, %v1003
        %v1007 = vsel %vm951, %v1005, -1e+30
        %vm1008 = vcmask 64512
        %v1009 = vsel %vm1008, %v1007, -inf
        %1010 = vmax.xlane.f32.xlu0 %v1009
        %v1011 = vpop.xlane.xlu0 %1010
        %v1012 = vsub.f32 %v1007, %v1011
        %v1013 = vmul.f32 %v1012, 1.442695
        %v1014 = vpow.pop %v1013
        %v1015 = vsel %vm1008, %v1014, 0.0
        %1016 = vadd.xlane.f32.xlu0 %v1015
        %v1017 = vpop.xlane.xlu0 %1016
        %v1018 = vrcp.pop %v1017
        %v1019 = vmul.f32 %v1014, %v1018
        %v1020 = vpack.c.bf16 %v1019, %v1019
        %v1021 = vld [vmem:[%s575] sm:$0xf]
        %v1022 = vld [vmem:[%s575 + $0x4] sm:$0xf]
        %v1023 = vld [vmem:[%s575 + $0x8] sm:$0xf]
        %v1024 = vld [vmem:[%s575 + $0xc] sm:$0xf]
        %v1025 = vld [vmem:[%s575 + $0x10] sm:$0xf]
        %v1026 = vld [vmem:[%s575 + $0x14] sm:$0xf]
        %v1027 = vld [vmem:[%s575 + $0x18] sm:$0xf]
        %v1028 = vld [vmem:[%s575 + $0x1c] sm:$0xf]
        %v1030 = vpack.i.b16 %v1020, %v1020
        %v1032 = vlaneseq
        %v1033 = vshrl.u32 %v1032, 7
        %v1034 = vsub.s32 0, %v1033
        %v1035 = vrot.slane %v1030, %v1034
        %1037 = vbcast.lane.c.b16.xlu0 %v1035, 256
        %v1038 = vpop.permute.xlu0 %1037
        %v1039 = vshrl.u32 %v1020, 16
        %v1040 = vpack.i.b16 %v1039, %v1039
        %v1042 = vlaneseq
        %v1043 = vshrl.u32 %v1042, 7
        %v1044 = vsub.s32 0, %v1043
        %v1045 = vrot.slane %v1040, %v1044
        %1047 = vbcast.lane.c.b16.xlu0 %v1045, 256
        %v1048 = vpop.permute.xlu0 %1047
        %v1049 = vlaneseq
        %v1050 = vshrl.u32 %v1049, 7
        %v1051 = vsub.s32 1, %v1050
        %v1052 = vrot.slane %v1030, %v1051
        %1054 = vbcast.lane.c.b16.xlu0 %v1052, 256
        %v1055 = vpop.permute.xlu0 %1054
        %v1056 = vlaneseq
        %v1057 = vshrl.u32 %v1056, 7
        %v1058 = vsub.s32 1, %v1057
        %v1059 = vrot.slane %v1040, %v1058
        %1061 = vbcast.lane.c.b16.xlu0 %v1059, 256
        %v1062 = vpop.permute.xlu0 %1061
        %v1063 = vlaneseq
        %v1064 = vshrl.u32 %v1063, 7
        %v1065 = vsub.s32 2, %v1064
        %v1066 = vrot.slane %v1030, %v1065
        %1068 = vbcast.lane.c.b16.xlu0 %v1066, 256
        %v1069 = vpop.permute.xlu0 %1068
        %v1070 = vlaneseq
        %v1071 = vshrl.u32 %v1070, 7
        %v1072 = vsub.s32 2, %v1071
        %v1073 = vrot.slane %v1040, %v1072
        %1075 = vbcast.lane.c.b16.xlu0 %v1073, 256
        %v1076 = vpop.permute.xlu0 %1075
        %v1077 = vlaneseq
        %v1078 = vshrl.u32 %v1077, 7
        %v1079 = vsub.s32 3, %v1078
        %v1080 = vrot.slane %v1030, %v1079
        %1082 = vbcast.lane.c.b16.xlu0 %v1080, 256
        %v1083 = vpop.permute.xlu0 %1082
        %v1084 = vlaneseq
        %v1085 = vshrl.u32 %v1084, 7
        %v1086 = vsub.s32 3, %v1085
        %v1087 = vrot.slane %v1040, %v1086
        %1089 = vbcast.lane.c.b16.xlu0 %v1087, 256
        %v1090 = vpop.permute.xlu0 %1089
        %v1091 = vmul.bf16 %v1021, %v1038
        %v1092 = vmul.bf16 %v1022, %v1048
        %v1093 = vmul.bf16 %v1023, %v1055
        %v1094 = vmul.bf16 %v1024, %v1062
        %v1095 = vmul.bf16 %v1025, %v1069
        %v1096 = vmul.bf16 %v1026, %v1076
        %v1097 = vmul.bf16 %v1027, %v1083
        %v1098 = vmul.bf16 %v1028, %v1090
        %v1099 = vunpack.c.l.bf16 %v1091
        %v1100 = vunpack.c.l.bf16 %v1092
        %v1101 = vunpack.c.l.bf16 %v1093
        %v1102 = vunpack.c.l.bf16 %v1094
        %v1103 = vunpack.c.l.bf16 %v1095
        %v1104 = vunpack.c.l.bf16 %v1096
        %v1105 = vunpack.c.l.bf16 %v1097
        %v1106 = vunpack.c.l.bf16 %v1098
        %v1107 = vrot.slane %v1099, 4
        %v1108 = vadd.f32 %v1099, %v1107
        %v1109 = vrot.slane %v1108, 2
        %v1110 = vadd.f32 %v1108, %v1109
        %v1111 = vrot.slane %v1110, 1
        %v1112 = vadd.f32 %v1110, %v1111
        %v1113 = vrot.slane %v1100, 4
        %v1114 = vadd.f32 %v1100, %v1113
        %v1115 = vrot.slane %v1114, 2
        %v1116 = vadd.f32 %v1114, %v1115
        %v1117 = vrot.slane %v1116, 1
        %v1118 = vadd.f32 %v1116, %v1117
        %v1119 = vrot.slane %v1101, 4
        %v1120 = vadd.f32 %v1101, %v1119
        %v1121 = vrot.slane %v1120, 2
        %v1122 = vadd.f32 %v1120, %v1121
        %v1123 = vrot.slane %v1122, 1
        %v1124 = vadd.f32 %v1122, %v1123
        %v1125 = vrot.slane %v1102, 4
        %v1126 = vadd.f32 %v1102, %v1125
        %v1127 = vrot.slane %v1126, 2
        %v1128 = vadd.f32 %v1126, %v1127
        %v1129 = vrot.slane %v1128, 1
        %v1130 = vadd.f32 %v1128, %v1129
        %v1131 = vrot.slane %v1103, 4
        %v1132 = vadd.f32 %v1103, %v1131
        %v1133 = vrot.slane %v1132, 2
        %v1134 = vadd.f32 %v1132, %v1133
        %v1135 = vrot.slane %v1134, 1
        %v1136 = vadd.f32 %v1134, %v1135
        %v1137 = vrot.slane %v1104, 4
        %v1138 = vadd.f32 %v1104, %v1137
        %v1139 = vrot.slane %v1138, 2
        %v1140 = vadd.f32 %v1138, %v1139
        %v1141 = vrot.slane %v1140, 1
        %v1142 = vadd.f32 %v1140, %v1141
        %v1143 = vrot.slane %v1105, 4
        %v1144 = vadd.f32 %v1105, %v1143
        %v1145 = vrot.slane %v1144, 2
        %v1146 = vadd.f32 %v1144, %v1145
        %v1147 = vrot.slane %v1146, 1
        %v1148 = vadd.f32 %v1146, %v1147
        %v1149 = vrot.slane %v1106, 4
        %v1150 = vadd.f32 %v1106, %v1149
        %v1151 = vrot.slane %v1150, 2
        %v1152 = vadd.f32 %v1150, %v1151
        %v1153 = vrot.slane %v1152, 1
        %v1154 = vadd.f32 %v1152, %v1153
        %v1155 = vld [vmem:[#allocation13] sm:$0xf]
        %v1156 = vld [vmem:[#allocation13 + $0x4] sm:$0xf]
        %v1157 = vld [vmem:[#allocation13 + $0x8] sm:$0xf]
        %v1158 = vld [vmem:[#allocation13 + $0xc] sm:$0xf]
        %v1159 = vld [vmem:[#allocation13 + $0x10] sm:$0xf]
        %v1160 = vld [vmem:[#allocation13 + $0x14] sm:$0xf]
        %v1161 = vld [vmem:[#allocation13 + $0x18] sm:$0xf]
        %v1162 = vld [vmem:[#allocation13 + $0x1c] sm:$0xf]
        %v1163 = vld [vmem:[#allocation13 + $0x20] sm:$0xf]
        %v1164 = vld [vmem:[#allocation13 + $0x24] sm:$0xf]
        %v1165 = vld [vmem:[#allocation13 + $0x28] sm:$0xf]
        %v1166 = vld [vmem:[#allocation13 + $0x2c] sm:$0xf]
        %v1167 = vld [vmem:[#allocation13 + $0x30] sm:$0xf]
        %v1168 = vld [vmem:[#allocation13 + $0x34] sm:$0xf]
        %v1169 = vld [vmem:[#allocation13 + $0x38] sm:$0xf]
        %v1170 = vld [vmem:[#allocation13 + $0x3c] sm:$0xf]
        %v1171 = vld [vmem:[#allocation15] sm:$0xf]
        %v1172 = vld [vmem:[#allocation15 + $0x4] sm:$0xf]
        %v1173 = vld [vmem:[#allocation15 + $0x8] sm:$0xf]
        %v1174 = vld [vmem:[#allocation15 + $0xc] sm:$0xf]
        %v1175 = vld [vmem:[#allocation15 + $0x10] sm:$0xf]
        %v1176 = vld [vmem:[#allocation15 + $0x14] sm:$0xf]
        %v1177 = vld [vmem:[#allocation15 + $0x18] sm:$0xf]
        %v1178 = vld [vmem:[#allocation15 + $0x1c] sm:$0xf]
        %v1179 = vld [vmem:[#allocation15 + $0x20] sm:$0xf]
        %v1180 = vld [vmem:[#allocation15 + $0x24] sm:$0xf]
        %v1181 = vld [vmem:[#allocation15 + $0x28] sm:$0xf]
        %v1182 = vld [vmem:[#allocation15 + $0x2c] sm:$0xf]
        %v1183 = vld [vmem:[#allocation15 + $0x30] sm:$0xf]
        %v1184 = vld [vmem:[#allocation15 + $0x34] sm:$0xf]
        %v1185 = vld [vmem:[#allocation15 + $0x38] sm:$0xf]
        %v1186 = vld [vmem:[#allocation15 + $0x3c] sm:$0xf]
        %v1203 = vunpack.c.l.b16 %v1171
        %v1204 = vunpack.c.l.b16 %v1172
        %v1205 = vunpack.c.l.b16 %v1173
        %v1206 = vunpack.c.l.b16 %v1174
        %v1207 = vunpack.c.l.b16 %v1175
        %v1208 = vunpack.c.l.b16 %v1176
        %v1209 = vunpack.c.l.b16 %v1177
        %v1210 = vunpack.c.l.b16 %v1178
        %v1211 = vunpack.c.l.b16 %v1179
        %v1212 = vunpack.c.l.b16 %v1180
        %v1213 = vunpack.c.l.b16 %v1181
        %v1214 = vunpack.c.l.b16 %v1182
        %v1215 = vunpack.c.l.b16 %v1183
        %v1216 = vunpack.c.l.b16 %v1184
        %v1217 = vunpack.c.l.b16 %v1185
        %v1218 = vunpack.c.l.b16 %v1186
        %v1219 = vpack.c.b16 %v1204, %v1203
        %v1220 = vpack.c.b16 %v1206, %v1205
        %v1221 = vpack.c.b16 %v1208, %v1207
        %v1222 = vpack.c.b16 %v1210, %v1209
        %v1223 = vpack.c.b16 %v1212, %v1211
        %v1224 = vpack.c.b16 %v1214, %v1213
        %v1225 = vpack.c.b16 %v1216, %v1215
        %v1226 = vpack.c.b16 %v1218, %v1217
        %1235 = vmatprep.subr.bf16.mxu0 0
        %1236 = vmatpush1.bf16.msra.mxu0 %v1219
        %1237 = vmatprep.subr.bf16.mxu0 0
        %1238 = vmatpush1.bf16.msra.mxu0 %v1220
        %1239 = vmatprep.subr.bf16.mxu0 0
        %1240 = vmatpush1.bf16.msra.mxu0 %v1221
        %1241 = vmatprep.subr.bf16.mxu0 0
        %1242 = vmatpush1.bf16.msra.mxu0 %v1222
        %1243 = vmatprep.subr.bf16.mxu0 0
        %1244 = vmatpush1.bf16.msra.mxu0 %v1223
        %1245 = vmatprep.subr.bf16.mxu0 0
        %1246 = vmatpush1.bf16.msra.mxu0 %v1224
        %1247 = vmatprep.subr.bf16.mxu0 0
        %1248 = vmatpush1.bf16.msra.mxu0 %v1225
        %1249 = vmatprep.subr.bf16.mxu0 0
        %1250 = vmatpush1.bf16.msra.mxu0 %v1226
        %1251 = vmatprep.subr.bf16.mxu0 0
        %1252 = vmatpush1.bf16.msra.mxu0 0
        %1253 = vmatprep.subr.bf16.mxu0 0
        %1254 = vmatpush1.bf16.msra.mxu0 0
        %1255 = vmatprep.subr.bf16.mxu0 0
        %1256 = vmatpush1.bf16.msra.mxu0 0
        %1257 = vmatprep.subr.bf16.mxu0 0
        %1258 = vmatpush1.bf16.msra.mxu0 0
        %1259 = vmatprep.subr.bf16.mxu0 0
        %1260 = vmatpush1.bf16.msra.mxu0 0
        %1261 = vmatprep.subr.bf16.mxu0 0
        %1262 = vmatpush1.bf16.msra.mxu0 0
        %1263 = vmatprep.subr.bf16.mxu0 0
        %1264 = vmatpush1.bf16.msra.mxu0 0
        %1265 = vmatprep.subr.bf16.mxu0 0
        %1266 = vmatpush1.bf16.msra.mxu0 0
        %1267 = vmatprep.mubr.bf16.mxu0 0
        %1268 = vmatmul.mubr.bf16.gmra.mrb[0].mxu0 %v665
        %v1269 = vpop.f32.mrb[0].mxu0
        %v1270 = vadd.f32 0.0, %v1269
        %v1271 = vpop.f32.mrb[0].mxu0
        %v1272 = vpop.f32.mrb[0].mxu0
        %v1273 = vpop.f32.mrb[0].mxu0
        %1274 = vdwg.mxu0
        %v1291 = vunpack.c.l.b16 %v1155
        %v1292 = vunpack.c.l.b16 %v1156
        %v1293 = vunpack.c.l.b16 %v1157
        %v1294 = vunpack.c.l.b16 %v1158
        %v1295 = vunpack.c.l.b16 %v1159
        %v1296 = vunpack.c.l.b16 %v1160
        %v1297 = vunpack.c.l.b16 %v1161
        %v1298 = vunpack.c.l.b16 %v1162
        %v1299 = vunpack.c.l.b16 %v1163
        %v1300 = vunpack.c.l.b16 %v1164
        %v1301 = vunpack.c.l.b16 %v1165
        %v1302 = vunpack.c.l.b16 %v1166
        %v1303 = vunpack.c.l.b16 %v1167
        %v1304 = vunpack.c.l.b16 %v1168
        %v1305 = vunpack.c.l.b16 %v1169
        %v1306 = vunpack.c.l.b16 %v1170
        %v1307 = vpack.c.b16 %v1292, %v1291
        %v1308 = vpack.c.b16 %v1294, %v1293
        %v1309 = vpack.c.b16 %v1296, %v1295
        %v1310 = vpack.c.b16 %v1298, %v1297
        %v1311 = vpack.c.b16 %v1300, %v1299
        %v1312 = vpack.c.b16 %v1302, %v1301
        %v1313 = vpack.c.b16 %v1304, %v1303
        %v1314 = vpack.c.b16 %v1306, %v1305
        %1323 = vmatprep.subr.bf16.mxu0 0
        %1324 = vmatpush1.bf16.msra.mxu0 %v1307
        %1325 = vmatprep.subr.bf16.mxu0 0
        %1326 = vmatpush1.bf16.msra.mxu0 %v1308
        %1327 = vmatprep.subr.bf16.mxu0 0
        %1328 = vmatpush1.bf16.msra.mxu0 %v1309
        %1329 = vmatprep.subr.bf16.mxu0 0
        %1330 = vmatpush1.bf16.msra.mxu0 %v1310
        %1331 = vmatprep.subr.bf16.mxu0 0
        %1332 = vmatpush1.bf16.msra.mxu0 %v1311
        %1333 = vmatprep.subr.bf16.mxu0 0
        %1334 = vmatpush1.bf16.msra.mxu0 %v1312
        %1335 = vmatprep.subr.bf16.mxu0 0
        %1336 = vmatpush1.bf16.msra.mxu0 %v1313
        %1337 = vmatprep.subr.bf16.mxu0 0
        %1338 = vmatpush1.bf16.msra.mxu0 %v1314
        %1339 = vmatprep.subr.bf16.mxu0 0
        %1340 = vmatpush1.bf16.msra.mxu0 0
        %1341 = vmatprep.subr.bf16.mxu0 0
        %1342 = vmatpush1.bf16.msra.mxu0 0
        %1343 = vmatprep.subr.bf16.mxu0 0
        %1344 = vmatpush1.bf16.msra.mxu0 0
        %1345 = vmatprep.subr.bf16.mxu0 0
        %1346 = vmatpush1.bf16.msra.mxu0 0
        %1347 = vmatprep.subr.bf16.mxu0 0
        %1348 = vmatpush1.bf16.msra.mxu0 0
        %1349 = vmatprep.subr.bf16.mxu0 0
        %1350 = vmatpush1.bf16.msra.mxu0 0
        %1351 = vmatprep.subr.bf16.mxu0 0
        %1352 = vmatpush1.bf16.msra.mxu0 0
        %1353 = vmatprep.subr.bf16.mxu0 0
        %1354 = vmatpush1.bf16.msra.mxu0 0
        %1355 = vmatprep.mubr.bf16.mxu0 0
        %1356 = vmatmul.mubr.bf16.gmra.mrb[0].mxu0 %v664
        %v1357 = vpop.f32.mrb[0].mxu0
        %v1358 = vadd.f32 %v1270, %v1357
        %v1359 = vpop.f32.mrb[0].mxu0
        %v1360 = vpop.f32.mrb[0].mxu0
        %v1361 = vpop.f32.mrb[0].mxu0
        %1362 = vdwg.mxu0
        %v1363 = vpack.c.bf16 %v1112, %v1112
        %v1364 = vpack.c.bf16 %v1118, %v1118
        %v1365 = vpack.c.bf16 %v1124, %v1124
        %v1366 = vpack.c.bf16 %v1130, %v1130
        %v1367 = vpack.c.bf16 %v1136, %v1136
        %v1368 = vpack.c.bf16 %v1142, %v1142
        %v1369 = vpack.c.bf16 %v1148, %v1148
        %v1370 = vpack.c.bf16 %v1154, %v1154
        %v1371 = vld [vmem:[#allocation16] sm:$0xf]
        %v1372 = vld [vmem:[#allocation16 + $0x4] sm:$0xf]
        %v1373 = vld [vmem:[#allocation16 + $0x8] sm:$0xf]
        %v1374 = vld [vmem:[#allocation16 + $0xc] sm:$0xf]
        %v1375 = vld [vmem:[#allocation16 + $0x10] sm:$0xf]
        %v1376 = vld [vmem:[#allocation16 + $0x14] sm:$0xf]
        %v1377 = vld [vmem:[#allocation16 + $0x18] sm:$0xf]
        %v1378 = vld [vmem:[#allocation16 + $0x1c] sm:$0xf]
        %v1379 = vld [vmem:[#allocation16 + $0x20] sm:$0xf]
        %v1380 = vld [vmem:[#allocation16 + $0x24] sm:$0xf]
        %v1381 = vld [vmem:[#allocation16 + $0x28] sm:$0xf]
        %v1382 = vld [vmem:[#allocation16 + $0x2c] sm:$0xf]
        %v1383 = vld [vmem:[#allocation16 + $0x30] sm:$0xf]
        %v1384 = vld [vmem:[#allocation16 + $0x34] sm:$0xf]
        %v1385 = vld [vmem:[#allocation16 + $0x38] sm:$0xf]
        %v1386 = vld [vmem:[#allocation16 + $0x3c] sm:$0xf]
        %v1395 = vunpack.c.l.b16 %v1363
        %v1396 = vunpack.c.l.b16 %v1364
        %v1397 = vunpack.c.l.b16 %v1365
        %v1398 = vunpack.c.l.b16 %v1366
        %v1399 = vunpack.c.l.b16 %v1367
        %v1400 = vunpack.c.l.b16 %v1368
        %v1401 = vunpack.c.l.b16 %v1369
        %v1402 = vunpack.c.l.b16 %v1370
        %v1403 = vsel %vm992, %v1396, %v1395
        %v1404 = vsel %vm994, %v1397, %v1403
        %v1405 = vsel %vm996, %v1398, %v1404
        %v1406 = vsel %vm998, %v1399, %v1405
        %v1407 = vsel %vm1000, %v1400, %v1406
        %v1408 = vsel %vm1002, %v1401, %v1407
        %v1409 = vsel %vm1004, %v1402, %v1408
        %v1410 = vpack.c.b16 %v1409, %v1409
        %v1428 = vunpack.c.l.b16 %v1371
        %v1429 = vunpack.c.l.b16 %v1372
        %v1430 = vunpack.c.l.b16 %v1373
        %v1431 = vunpack.c.l.b16 %v1374
        %v1432 = vunpack.c.l.b16 %v1375
        %v1433 = vunpack.c.l.b16 %v1376
        %v1434 = vunpack.c.l.b16 %v1377
        %v1435 = vunpack.c.l.b16 %v1378
        %v1436 = vunpack.c.l.b16 %v1379
        %v1437 = vunpack.c.l.b16 %v1380
        %v1438 = vunpack.c.l.b16 %v1381
        %v1439 = vunpack.c.l.b16 %v1382
        %v1440 = vunpack.c.l.b16 %v1383
        %v1441 = vunpack.c.l.b16 %v1384
        %v1442 = vunpack.c.l.b16 %v1385
        %v1443 = vunpack.c.l.b16 %v1386
        %v1444 = vpack.c.b16 %v1429, %v1428
        %v1445 = vpack.c.b16 %v1431, %v1430
        %v1446 = vpack.c.b16 %v1433, %v1432
        %v1447 = vpack.c.b16 %v1435, %v1434
        %v1448 = vpack.c.b16 %v1437, %v1436
        %v1449 = vpack.c.b16 %v1439, %v1438
        %v1450 = vpack.c.b16 %v1441, %v1440
        %v1451 = vpack.c.b16 %v1443, %v1442
        %1460 = vmatprep.subr.bf16.mxu0 0
        %1461 = vmatpush1.bf16.msra.mxu0 %v1444
        %1462 = vmatprep.subr.bf16.mxu0 0
        %1463 = vmatpush1.bf16.msra.mxu0 %v1445
        %1464 = vmatprep.subr.bf16.mxu0 0
        %1465 = vmatpush1.bf16.msra.mxu0 %v1446
        %1466 = vmatprep.subr.bf16.mxu0 0
        %1467 = vmatpush1.bf16.msra.mxu0 %v1447
        %1468 = vmatprep.subr.bf16.mxu0 0
        %1469 = vmatpush1.bf16.msra.mxu0 %v1448
        %1470 = vmatprep.subr.bf16.mxu0 0
        %1471 = vmatpush1.bf16.msra.mxu0 %v1449
        %1472 = vmatprep.subr.bf16.mxu0 0
        %1473 = vmatpush1.bf16.msra.mxu0 %v1450
        %1474 = vmatprep.subr.bf16.mxu0 0
        %1475 = vmatpush1.bf16.msra.mxu0 %v1451
        %1476 = vmatprep.subr.bf16.mxu0 0
        %1477 = vmatpush1.bf16.msra.mxu0 0
        %1478 = vmatprep.subr.bf16.mxu0 0
        %1479 = vmatpush1.bf16.msra.mxu0 0
        %1480 = vmatprep.subr.bf16.mxu0 0
        %1481 = vmatpush1.bf16.msra.mxu0 0
        %1482 = vmatprep.subr.bf16.mxu0 0
        %1483 = vmatpush1.bf16.msra.mxu0 0
        %1484 = vmatprep.subr.bf16.mxu0 0
        %1485 = vmatpush1.bf16.msra.mxu0 0
        %1486 = vmatprep.subr.bf16.mxu0 0
        %1487 = vmatpush1.bf16.msra.mxu0 0
        %1488 = vmatprep.subr.bf16.mxu0 0
        %1489 = vmatpush1.bf16.msra.mxu0 0
        %1490 = vmatprep.subr.bf16.mxu0 0
        %1491 = vmatpush1.bf16.msra.mxu0 0
        %1492 = vmatprep.mubr.bf16.mxu0 0
        %1493 = vmatmul.mubr.bf16.gmra.mrb[0].mxu0 %v1410
        %v1494 = vpop.f32.mrb[0].mxu0
        %v1495 = vadd.f32 0.0, %v1494
        %v1496 = vpop.f32.mrb[0].mxu0
        %v1497 = vpop.f32.mrb[0].mxu0
        %v1498 = vpop.f32.mrb[0].mxu0
        %1499 = vdwg.mxu0
        %v1500 = vadd.f32 %v1358, %v1495
        %v1501 = vld [vmem:[%s11] sm:$0x1]
        %v1502 = vunpack.c.l.bf16 %v1501
        %v1503 = vlaneseq
        %v1504 = vshrl.u32 %v1503, 7
        %v1505 = vsub.s32 0, %v1504
        %v1506 = vrot.slane %v1502, %v1505
        %v1507 = vadd.f32 %v1500, %v1506
        %v1508 = vld [vmem:[#allocation18] sm:$0xf]
        %v1509 = vld [vmem:[#allocation18 + $0x4] sm:$0xf]
        %v1510 = vld [vmem:[#allocation18 + $0x8] sm:$0xf]
        %v1511 = vld [vmem:[#allocation18 + $0xc] sm:$0xf]
        %v1512 = vld [vmem:[#allocation18 + $0x10] sm:$0xf]
        %v1513 = vld [vmem:[#allocation18 + $0x14] sm:$0xf]
        %v1514 = vld [vmem:[#allocation18 + $0x18] sm:$0xf]
        %v1515 = vld [vmem:[#allocation18 + $0x1c] sm:$0xf]
        %v1516 = vld [vmem:[#allocation18 + $0x20] sm:$0xf]
        %v1517 = vld [vmem:[#allocation18 + $0x24] sm:$0xf]
        %v1518 = vld [vmem:[#allocation18 + $0x28] sm:$0xf]
        %v1519 = vld [vmem:[#allocation18 + $0x2c] sm:$0xf]
        %v1520 = vld [vmem:[#allocation18 + $0x30] sm:$0xf]
        %v1521 = vld [vmem:[#allocation18 + $0x34] sm:$0xf]
        %v1522 = vld [vmem:[#allocation18 + $0x38] sm:$0xf]
        %v1523 = vld [vmem:[#allocation18 + $0x3c] sm:$0xf]
        %v1524 = vld [vmem:[%s13] sm:$0x1]
        %v1525 = vunpack.c.l.bf16 %v1524
        %v1526 = vlaneseq
        %v1527 = vshrl.u32 %v1526, 7
        %v1528 = vsub.s32 0, %v1527
        %v1529 = vrot.slane %v1525, %v1528
        %v1546 = vunpack.c.l.b16 %v1508
        %v1547 = vunpack.c.l.b16 %v1509
        %v1548 = vunpack.c.l.b16 %v1510
        %v1549 = vunpack.c.l.b16 %v1511
        %v1550 = vunpack.c.l.b16 %v1512
        %v1551 = vunpack.c.l.b16 %v1513
        %v1552 = vunpack.c.l.b16 %v1514
        %v1553 = vunpack.c.l.b16 %v1515
        %v1554 = vunpack.c.l.b16 %v1516
        %v1555 = vunpack.c.l.b16 %v1517
        %v1556 = vunpack.c.l.b16 %v1518
        %v1557 = vunpack.c.l.b16 %v1519
        %v1558 = vunpack.c.l.b16 %v1520
        %v1559 = vunpack.c.l.b16 %v1521
        %v1560 = vunpack.c.l.b16 %v1522
        %v1561 = vunpack.c.l.b16 %v1523
        %v1562 = vpack.c.b16 %v1547, %v1546
        %v1563 = vpack.c.b16 %v1549, %v1548
        %v1564 = vpack.c.b16 %v1551, %v1550
        %v1565 = vpack.c.b16 %v1553, %v1552
        %v1566 = vpack.c.b16 %v1555, %v1554
        %v1567 = vpack.c.b16 %v1557, %v1556
        %v1568 = vpack.c.b16 %v1559, %v1558
        %v1569 = vpack.c.b16 %v1561, %v1560
        %1578 = vmatprep.subr.bf16.mxu0 0
        %1579 = vmatpush1.bf16.msra.mxu0 %v1562
        %1580 = vmatprep.subr.bf16.mxu0 0
        %1581 = vmatpush1.bf16.msra.mxu0 %v1563
        %1582 = vmatprep.subr.bf16.mxu0 0
        %1583 = vmatpush1.bf16.msra.mxu0 %v1564
        %1584 = vmatprep.subr.bf16.mxu0 0
        %1585 = vmatpush1.bf16.msra.mxu0 %v1565
        %1586 = vmatprep.subr.bf16.mxu0 0
        %1587 = vmatpush1.bf16.msra.mxu0 %v1566
        %1588 = vmatprep.subr.bf16.mxu0 0
        %1589 = vmatpush1.bf16.msra.mxu0 %v1567
        %1590 = vmatprep.subr.bf16.mxu0 0
        %1591 = vmatpush1.bf16.msra.mxu0 %v1568
        %1592 = vmatprep.subr.bf16.mxu0 0
        %1593 = vmatpush1.bf16.msra.mxu0 %v1569
        %1594 = vmatprep.subr.bf16.mxu0 0
        %1595 = vmatpush1.bf16.msra.mxu0 0
        %1596 = vmatprep.subr.bf16.mxu0 0
        %1597 = vmatpush1.bf16.msra.mxu0 0
        %1598 = vmatprep.subr.bf16.mxu0 0
        %1599 = vmatpush1.bf16.msra.mxu0 0
        %1600 = vmatprep.subr.bf16.mxu0 0
        %1601 = vmatpush1.bf16.msra.mxu0 0
        %1602 = vmatprep.subr.bf16.mxu0 0
        %1603 = vmatpush1.bf16.msra.mxu0 0
        %1604 = vmatprep.subr.bf16.mxu0 0
        %1605 = vmatpush1.bf16.msra.mxu0 0
        %1606 = vmatprep.subr.bf16.mxu0 0
        %1607 = vmatpush1.bf16.msra.mxu0 0
        %1608 = vmatprep.subr.bf16.mxu0 0
        %1609 = vmatpush1.bf16.msra.mxu0 0
        %1610 = vmatprep.mubr.bf16.mxu0 0
        %1611 = vmatmul.mubr.bf16.gmra.mrb[0].mxu0 %v666
        %v1612 = vpop.f32.mrb[0].mxu0
        %v1613 = vadd.f32 %v1529, %v1612
        %v1614 = vpop.f32.mrb[0].mxu0
        %v1615 = vpop.f32.mrb[0].mxu0
        %v1616 = vpop.f32.mrb[0].mxu0
        %1617 = vdwg.mxu0
        %v1618 = vxor.u32 %v1613, 2147483648
        %v1619 = vmul.f32 %v1618, 1.442695
        %v1620 = vpow.pop %v1619
        %v1621 = vadd.f32 %v1620, 1.0
        %v1622 = vrcp.pop %v1621
        %v1623 = vmul.f32 1.0, %v1622
        %v1624 = vunpack.c.l.bf16 %v664
        %v1625 = vmul.f32 %v1507, %v1623
        %v1626 = vsub.f32 1.0, %v1623
        %v1627 = vmul.f32 %v1624, %v1626
        %v1628 = vadd.f32 %v1625, %v1627
        %v1629 = vpack.c.bf16 %v1628, %v1628
        %1630 = vst [vmem:[%s656] sm:$0xf] %v1629
        %s1631 = sand.u32 %s346, 1
        %s1632 = scalar_lea.sflag [#allocation6], %s1631
        %s1633 = sand.u32 %s346, 1
        %s1634 = smul.addr %s1633, 4
        %s1635 = scalar_lea.vmem [#allocation19], %s1634
        // Predicated region
        $region109: #{tpu_custom_call.1} parent=71 // pred_check
          %p1636 = pneg %p356
        $region110: #{tpu_custom_call.1} parent=71 // pred_check_branch
          %1638 = sbr.rel (%p1636) target = $region112
        $region111: #{tpu_custom_call.1} parent=71 // pred_region
          %s1640 = ssub.s32 64, 64
          %1641 = vsyncadd %s1632, %s1640
          %s1642 = smul.addr %s40, 64
          %s1643 = scalar_lea.hbm %s14, %s1642
          %s1645 = sshll.u32 %s1635, 4
          %s1646 = int_to_ptr.vmem [resolvable:$true] %s1645
          %1648 = dma.vmem_to_hbm [thread:$0]  %s1646, 64, %s1643, %s1632
        $region112: #{tpu_custom_call.1} parent=71 // pred_fallthru
          _
      $region72: #{tpu_custom_call.1} parent=5 // pred_fallthru
        _
      %p1649 = scmp.le.s32.totalorder 2, %s35
      // Predicated region
      $region113: #{tpu_custom_call.1} parent=5 // pred_check
        %p1650 = pneg %p1649
      $region114: #{tpu_custom_call.1} parent=5 // pred_check_branch
        %1652 = sbr.rel (%p1650) target = $region116
      $region115: #{tpu_custom_call.1} parent=5 // pred_region
        %s1653 = ssub.s32 %s35, 2
        // Predicated region
        $region117: #{tpu_custom_call.1} parent=115 // pred_check
          %p1654 = pneg %p362
        $region118: #{tpu_custom_call.1} parent=115 // pred_check_branch
          %1656 = sbr.rel (%p1654) target = $region120
        $region119: #{tpu_custom_call.1} parent=115 // pred_region
          %s1657 = sand.u32 %s347, 1
          %s1658 = scalar_lea.sflag [#allocation6], %s1657
          %s1659 = sand.u32 %s347, 1
          %s1660 = smul.addr %s1659, 4
          %s1661 = scalar_lea.vmem [#allocation19], %s1660
          %1662 = dma.done %s1658, 64
        $region120: #{tpu_custom_call.1} parent=115 // pred_fallthru
          _
      $region116: #{tpu_custom_call.1} parent=5 // pred_fallthru
        _
    $region6: #{tpu_custom_call.1} parent=1 // loop_footer
      %s39 = sadd.s32 1, %s35
    $region7: #{tpu_custom_call.1} parent=1 // loop_footer_branch
      %34 = sbr.rel target = $region3
    $region8: #{tpu_custom_call.1} parent=1 // loop_exit
      _
    %1663 = vsyncpa [#allocation5], 1
    %s1664 = scalar_lea.sflag [#allocation5], 1
    %1665 = vsyncpa %s1664, 1
    %1666 = vsyncpa [#allocation8], 1
    %s1667 = scalar_lea.sflag [#allocation8], 1
    %1668 = vsyncpa %s1667, 1
    %1669 = vsyncpa [#allocation11], 1
    %s1670 = scalar_lea.sflag [#allocation11], 1
    %1671 = vsyncpa %s1670, 1
    %1672 = vsyncpa [#allocation14], 1
    %1673 = vsyncpa [#allocation17], 1
    %1674 = vsyncpa [#allocation6], 1
    %s1675 = scalar_lea.sflag [#allocation6], 1
    %1676 = vsyncpa %s1675, 1

</llo_original>
